<compile_context>
chip_gen: v7x
topology: tpu7x:2x2x1
jax: 0.10.0
libtpu: 0.0.40
codegen_flags: <defaults>
</compile_context>

<pallas_src>
import math
import functools

import jax
import jax.numpy as jnp
from jax.experimental import pallas as pl
from jax.experimental.pallas import tpu as pltpu


def cross_attn_kernel(x_ref, ctx_ref, wq_ref, wkv_ref, woh_ref,
                      bq_ref, bkv_ref, bo_ref, o_ref, *, nhead, n_batch):
    """Multihead cross attention with all batches packed into one grid step.

    x_ref:   (N*Sq, C)       query tokens
    ctx_ref: (N*Sk, C)       key/value tokens
    wq_ref:  (C, C)          pre-transposed, scale-folded:  q = x @ wq
    wkv_ref: (C, 2C)         pre-transposed fused [Wk.T | Wv.T]: kv = ctx @ wkv
    woh_ref: (nhead, dh, C)  out-proj weight, pre-transposed and split per head
    bq_ref:  (1, C)          scale-folded query bias
    bkv_ref: (1, 2C)         fused [bk | bv]
    bo_ref:  (1, C)          output-projection bias
    o_ref:   (N*Sq, C)
    """
    x = x_ref[...]
    ctx = ctx_ref[...]
    n_sq, c = x.shape
    n_sk = ctx.shape[0]
    sq = n_sq // n_batch
    sk = n_sk // n_batch
    dh = c // nhead

    # Fused projections: one GEMM for Q, one (2x wider) GEMM for K|V.
    q = jnp.dot(x, wq_ref[...], preferred_element_type=jnp.float32) + bq_ref[...]
    kv = jnp.dot(ctx, wkv_ref[...], preferred_element_type=jnp.float32) + bkv_ref[...]

    # Leading-dim-only reshapes (row counts are multiples of 8 -> layout-trivial).
    q3 = q.reshape(n_batch, sq, c)
    kv3 = kv.reshape(n_batch, sk, 2 * c)

    acc = jnp.zeros((n_sq, c), dtype=jnp.float32)
    for h in range(nhead):  # static unroll; nhead is small
        qh = q3[:, :, h * dh:(h + 1) * dh]            # (N, Sq, dh)
        kh = kv3[:, :, h * dh:(h + 1) * dh]           # (N, Sk, dh)
        vh = kv3[:, :, c + h * dh:c + (h + 1) * dh]   # (N, Sk, dh)

        # Batched over N, contraction over the last dims (no explicit transpose).
        s = jnp.einsum('nqd,nkd->nqk', qh, kh, preferred_element_type=jnp.float32)
        s = s - jnp.max(s, axis=-1, keepdims=True)
        p = jnp.exp(s)
        p = p * pl.reciprocal(jnp.sum(p, axis=-1, keepdims=True), approx=True)
        oh = jnp.einsum('nqk,nkd->nqd', p, vh, preferred_element_type=jnp.float32)

        # Fold head h straight through its slice of the output projection:
        # attn @ Wo.T == sum_h oh @ Wo.T[h*dh:(h+1)*dh, :]  -> no concat needed.
        acc = acc + jnp.dot(oh.reshape(n_sq, dh), woh_ref[h],
                            preferred_element_type=jnp.float32)

    o_ref[...] = acc + bo_ref[...]


def cross_attention_pallas(x_nchw, ctx_nchw, params, nhead):
    """Pallas implementation of CrossAttention.forward (NCHW in, NCHW out)."""
    wq, wk, wv, wo, bq, bk, bv, bo = params
    N, C, H, W = x_nchw.shape
    Sq = H * W
    Sk = ctx_nchw.shape[2] * ctx_nchw.shape[3]
    dh = C // nhead
    scale = 1.0 / math.sqrt(dh)

    # NCHW -> (N*S, C) token rows (done once in XLA, outside the kernel).
    x2 = x_nchw.reshape(N, C, Sq).transpose(0, 2, 1).reshape(N * Sq, C).astype(jnp.float32)
    ctx2 = ctx_nchw.reshape(N, C, Sk).transpose(0, 2, 1).reshape(N * Sk, C).astype(jnp.float32)

    # Pre-transpose weights so the kernel never transposes; fold the 1/sqrt(dh)
    # scale into the Q projection; fuse K and V into one weight/bias.
    wq_t = (wq * scale).T                                # (C, C)
    bq_s = (bq * scale).reshape(1, C)                    # (1, C)
    wkv_t = jnp.concatenate([wk.T, wv.T], axis=1)        # (C, 2C)
    bkv = jnp.concatenate([bk, bv]).reshape(1, 2 * C)    # (1, 2C)
    wo_h = wo.T.reshape(nhead, dh, C)                    # per-head out-proj slabs
    bo2 = bo.reshape(1, C)

    kernel = functools.partial(cross_attn_kernel, nhead=nhead, n_batch=N)

    out2 = pl.pallas_call(
        kernel,
        out_shape=jax.ShapeDtypeStruct((N * Sq, C), jnp.float32),
        grid=(1,),
        in_specs=[
            pl.BlockSpec((N * Sq, C), lambda i: (0, 0)),       # x tokens
            pl.BlockSpec((N * Sk, C), lambda i: (0, 0)),       # context tokens
            pl.BlockSpec((C, C), lambda i: (0, 0)),            # Wq (pre-T, scaled)
            pl.BlockSpec((C, 2 * C), lambda i: (0, 0)),        # Wk|Wv (pre-T, fused)
            pl.BlockSpec((nhead, dh, C), lambda i: (0, 0, 0)),  # Wo per-head slabs
            pl.BlockSpec((1, C), lambda i: (0, 0)),            # bq (scaled)
            pl.BlockSpec((1, 2 * C), lambda i: (0, 0)),        # bk|bv
            pl.BlockSpec((1, C), lambda i: (0, 0)),            # bo
        ],
        out_specs=pl.BlockSpec((N * Sq, C), lambda i: (0, 0)),
        compiler_params=pltpu.CompilerParams(dimension_semantics=("arbitrary",)),
    )(x2, ctx2, wq_t, wkv_t, wo_h, bq_s, bkv, bo2)

    # (N*Sq, C) -> (N, C, H, W)
    return out2.reshape(N, Sq, C).transpose(0, 2, 1).reshape(N, C, H, W)


def cross_attention_ref(x_nchw, ctx_nchw, params, nhead):
    """Pure-JAX reference matching nn.MultiheadAttention semantics."""
    wq, wk, wv, wo, bq, bk, bv, bo = params
    N, C, H, W = x_nchw.shape
    Sq = H * W
    Sk = ctx_nchw.shape[2] * ctx_nchw.shape[3]
    x = x_nchw.reshape(N, C, Sq).transpose(0, 2, 1)
    ctx = ctx_nchw.reshape(N, C, Sk).transpose(0, 2, 1)

    q = x @ wq.T + bq
    k = ctx @ wk.T + bk
    v = ctx @ wv.T + bv
    dh = C // nhead
    q = q.reshape(N, Sq, nhead, dh).transpose(0, 2, 1, 3) / math.sqrt(dh)
    k = k.reshape(N, Sk, nhead, dh).transpose(0, 2, 1, 3)
    v = v.reshape(N, Sk, nhead, dh).transpose(0, 2, 1, 3)
    s = jnp.einsum("bhqd,bhkd->bhqk", q, k)
    p = jax.nn.softmax(s, axis=-1)
    o = jnp.einsum("bhqk,bhkd->bhqd", p, v)
    o = o.transpose(0, 2, 1, 3).reshape(N, Sq, C)
    o = o @ wo.T + bo
    return o.transpose(0, 2, 1).reshape(N, C, H, W)


def init_params(key, d_model):
    """Deterministic init mimicking nn.MultiheadAttention param shapes."""
    k1, k2, k3 = jax.random.split(key, 3)
    bound = 1.0 / math.sqrt(d_model)
    in_proj_w = jax.random.uniform(k1, (3 * d_model, d_model),
                                   minval=-bound, maxval=bound, dtype=jnp.float32)
    in_proj_b = jax.random.uniform(k2, (3 * d_model,),
                                   minval=-bound, maxval=bound, dtype=jnp.float32)
    out_proj_w = jax.random.uniform(k3, (d_model, d_model),
                                    minval=-bound, maxval=bound, dtype=jnp.float32)
    out_proj_b = jnp.zeros((d_model,), dtype=jnp.float32)
    wq, wk, wv = (in_proj_w[0:d_model], in_proj_w[d_model:2 * d_model],
                  in_proj_w[2 * d_model:3 * d_model])
    bq, bk, bv = (in_proj_b[0:d_model], in_proj_b[d_model:2 * d_model],
                  in_proj_b[2 * d_model:3 * d_model])
    return (wq, wk, wv, out_proj_w, bq, bk, bv, out_proj_b)


if __name__ == "__main__":
    d_model = 32     # C
    nhead = 4
    N, H, W = 2, 4, 4

    key = jax.random.PRNGKey(0)
    kx, kc, kp = jax.random.split(key, 3)
    x = jax.random.normal(kx, (N, d_model, H, W), dtype=jnp.float32)
    context = jax.random.normal(kc, (N, d_model, H, W), dtype=jnp.float32)
    params = init_params(kp, d_model)

    out = cross_attention_pallas(x, context, params, nhead)
    out = jax.block_until_ready(out)

    ref = cross_attention_ref(x, context, params, nhead)
    assert out.shape == (N, d_model, H, W)
    assert jnp.allclose(out, ref, rtol=2e-2, atol=2e-2), "mismatch vs. JAX reference"

    print("KERNEL_OK")
</pallas_src>

<mosaic_0001>
module attributes {stable_mosaic.version = 11 : i64} {
  func.func @cross_attn_kernel(%arg0: i32, %arg1: memref<32x32xf32, #tpu.memory_space<vmem>>, %arg2: memref<32x32xf32, #tpu.memory_space<vmem>>, %arg3: memref<32x32xf32, #tpu.memory_space<vmem>>, %arg4: memref<32x64xf32, #tpu.memory_space<vmem>>, %arg5: memref<4x8x32xf32, #tpu.memory_space<vmem>>, %arg6: memref<1x32xf32, #tpu.memory_space<vmem>>, %arg7: memref<1x64xf32, #tpu.memory_space<vmem>>, %arg8: memref<1x32xf32, #tpu.memory_space<vmem>>, %arg9: memref<32x32xf32, #tpu.memory_space<vmem>>) attributes {dimension_semantics = [#tpu.dimension_semantics<arbitrary>], iteration_bounds = array<i64: 1>, scalar_prefetch = 0 : i64, scratch_operands = 0 : i64, tpu.core_type = #tpu.core_type<tc>, window_params = [{pipeline_mode = #tpu.pipeline_mode<synchronous>, transform_indices = @transform_0, window_bounds = array<i64: 32, 32>}, {pipeline_mode = #tpu.pipeline_mode<synchronous>, transform_indices = @transform_1, window_bounds = array<i64: 32, 32>}, {pipeline_mode = #tpu.pipeline_mode<synchronous>, transform_indices = @transform_2, window_bounds = array<i64: 32, 32>}, {pipeline_mode = #tpu.pipeline_mode<synchronous>, transform_indices = @transform_3, window_bounds = array<i64: 32, 64>}, {pipeline_mode = #tpu.pipeline_mode<synchronous>, transform_indices = @transform_4, window_bounds = array<i64: 4, 8, 32>}, {pipeline_mode = #tpu.pipeline_mode<synchronous>, transform_indices = @transform_5, window_bounds = array<i64: 1, 32>}, {pipeline_mode = #tpu.pipeline_mode<synchronous>, transform_indices = @transform_6, window_bounds = array<i64: 1, 64>}, {pipeline_mode = #tpu.pipeline_mode<synchronous>, transform_indices = @transform_7, window_bounds = array<i64: 1, 32>}, {pipeline_mode = #tpu.pipeline_mode<synchronous>, transform_indices = @transform_8, window_bounds = array<i64: 32, 32>}]} {
    %c0 = arith.constant 0 : index
    %c0_0 = arith.constant 0 : index
    %0 = vector.load %arg1[%c0, %c0_0] : memref<32x32xf32, #tpu.memory_space<vmem>>, vector<32x32xf32>
    %c0_1 = arith.constant 0 : index
    %c0_2 = arith.constant 0 : index
    %1 = vector.load %arg2[%c0_1, %c0_2] : memref<32x32xf32, #tpu.memory_space<vmem>>, vector<32x32xf32>
    %c0_3 = arith.constant 0 : index
    %c0_4 = arith.constant 0 : index
    %2 = vector.load %arg3[%c0_3, %c0_4] : memref<32x32xf32, #tpu.memory_space<vmem>>, vector<32x32xf32>
    %cst = arith.constant dense<0.000000e+00> : vector<32x32xf32>
    %3 = tpu.matmul %0, %2, %cst {dimension_numbers = #tpu.dot_dimension_numbers<[1], [0], [0], [1], [0, 0, 1, 1], [], []>} : vector<32x32xf32>, vector<32x32xf32>, vector<32x32xf32> -> vector<32x32xf32>
    %c0_5 = arith.constant 0 : index
    %c0_6 = arith.constant 0 : index
    %4 = vector.load %arg6[%c0_5, %c0_6] : memref<1x32xf32, #tpu.memory_space<vmem>>, vector<1x32xf32>
    %5 = vector.broadcast %4 : vector<1x32xf32> to vector<32x32xf32>
    %6 = arith.addf %3, %5 : vector<32x32xf32>
    %c0_7 = arith.constant 0 : index
    %c0_8 = arith.constant 0 : index
    %7 = vector.load %arg4[%c0_7, %c0_8] : memref<32x64xf32, #tpu.memory_space<vmem>>, vector<32x64xf32>
    %cst_9 = arith.constant dense<0.000000e+00> : vector<32x64xf32>
    %8 = tpu.matmul %1, %7, %cst_9 {dimension_numbers = #tpu.dot_dimension_numbers<[1], [0], [0], [1], [0, 0, 1, 1], [], []>} : vector<32x32xf32>, vector<32x64xf32>, vector<32x64xf32> -> vector<32x64xf32>
    %c0_10 = arith.constant 0 : index
    %c0_11 = arith.constant 0 : index
    %9 = vector.load %arg7[%c0_10, %c0_11] : memref<1x64xf32, #tpu.memory_space<vmem>>, vector<1x64xf32>
    %10 = vector.broadcast %9 : vector<1x64xf32> to vector<32x64xf32>
    %11 = arith.addf %8, %10 : vector<32x64xf32>
    %12 = vector.shape_cast %6 : vector<32x32xf32> to vector<2x16x32xf32>
    %13 = vector.shape_cast %11 : vector<32x64xf32> to vector<2x16x64xf32>
    %cst_12 = arith.constant 0.000000e+00 : f32
    %14 = vector.broadcast %cst_12 : f32 to vector<32x32xf32>
    %15 = vector.extract_strided_slice %12 {offsets = [0, 0, 0], sizes = [2, 16, 8], strides = [1, 1, 1]} : vector<2x16x32xf32> to vector<2x16x8xf32>
    %16 = vector.extract_strided_slice %13 {offsets = [0, 0, 0], sizes = [2, 16, 8], strides = [1, 1, 1]} : vector<2x16x64xf32> to vector<2x16x8xf32>
    %17 = vector.extract_strided_slice %13 {offsets = [0, 0, 32], sizes = [2, 16, 8], strides = [1, 1, 1]} : vector<2x16x64xf32> to vector<2x16x8xf32>
    "tpu.trace_start"() <{level = 10 : i32, message = "nqd,nkd->nqk"}> : () -> ()
    %cst_13 = arith.constant dense<0.000000e+00> : vector<2x16x16xf32>
    %18 = tpu.matmul %15, %16, %cst_13 {dimension_numbers = #tpu.dot_dimension_numbers<[2], [2], [1], [1], [0, 0, 0, 1, 1, 1], [0], [0]>} : vector<2x16x8xf32>, vector<2x16x8xf32>, vector<2x16x16xf32> -> vector<2x16x16xf32>
    "tpu.trace_stop"() : () -> ()
    %cst_14 = arith.constant dense<0xFF800000> : vector<2x16xf32>
    %19 = vector.multi_reduction <maximumf>, %18, %cst_14 [2] : vector<2x16x16xf32> to vector<2x16xf32>
    %20 = vector.shape_cast %19 : vector<2x16xf32> to vector<2x16x1xf32>
    %21 = vector.broadcast %20 : vector<2x16x1xf32> to vector<2x16x16xf32>
    %22 = arith.subf %18, %21 : vector<2x16x16xf32>
    %23 = math.exp %22 : vector<2x16x16xf32>
    %cst_15 = arith.constant dense<0.000000e+00> : vector<2x16xf32>
    %24 = vector.multi_reduction <add>, %23, %cst_15 [2] : vector<2x16x16xf32> to vector<2x16xf32>
    %25 = vector.shape_cast %24 : vector<2x16xf32> to vector<2x16x1xf32>
    %26 = tpu.reciprocal %25 {approx = true} : vector<2x16x1xf32> -> vector<2x16x1xf32>
    %27 = vector.broadcast %26 : vector<2x16x1xf32> to vector<2x16x16xf32>
    %28 = arith.mulf %23, %27 : vector<2x16x16xf32>
    "tpu.trace_start"() <{level = 10 : i32, message = "nqk,nkd->nqd"}> : () -> ()
    %cst_16 = arith.constant dense<0.000000e+00> : vector<2x16x8xf32>
    %29 = tpu.matmul %28, %17, %cst_16 {dimension_numbers = #tpu.dot_dimension_numbers<[2], [1], [1], [2], [0, 0, 0, 1, 1, 2], [0], [0]>} : vector<2x16x16xf32>, vector<2x16x8xf32>, vector<2x16x8xf32> -> vector<2x16x8xf32>
    "tpu.trace_stop"() : () -> ()
    %30 = vector.shape_cast %29 : vector<2x16x8xf32> to vector<32x8xf32>
    %c0_17 = arith.constant 0 : index
    %c0_18 = arith.constant 0 : index
    %c0_19 = arith.constant 0 : index
    %31 = vector.load %arg5[%c0_17, %c0_18, %c0_19] : memref<4x8x32xf32, #tpu.memory_space<vmem>>, vector<1x8x32xf32>
    %32 = vector.shape_cast %31 : vector<1x8x32xf32> to vector<8x32xf32>
    %cst_20 = arith.constant dense<0.000000e+00> : vector<32x32xf32>
    %33 = tpu.matmul %30, %32, %cst_20 {dimension_numbers = #tpu.dot_dimension_numbers<[1], [0], [0], [1], [0, 0, 1, 1], [], []>} : vector<32x8xf32>, vector<8x32xf32>, vector<32x32xf32> -> vector<32x32xf32>
    %34 = arith.addf %14, %33 : vector<32x32xf32>
    %35 = vector.extract_strided_slice %12 {offsets = [0, 0, 8], sizes = [2, 16, 8], strides = [1, 1, 1]} : vector<2x16x32xf32> to vector<2x16x8xf32>
    %36 = vector.extract_strided_slice %13 {offsets = [0, 0, 8], sizes = [2, 16, 8], strides = [1, 1, 1]} : vector<2x16x64xf32> to vector<2x16x8xf32>
    %37 = vector.extract_strided_slice %13 {offsets = [0, 0, 40], sizes = [2, 16, 8], strides = [1, 1, 1]} : vector<2x16x64xf32> to vector<2x16x8xf32>
    "tpu.trace_start"() <{level = 10 : i32, message = "nqd,nkd->nqk"}> : () -> ()
    %cst_21 = arith.constant dense<0.000000e+00> : vector<2x16x16xf32>
    %38 = tpu.matmul %35, %36, %cst_21 {dimension_numbers = #tpu.dot_dimension_numbers<[2], [2], [1], [1], [0, 0, 0, 1, 1, 1], [0], [0]>} : vector<2x16x8xf32>, vector<2x16x8xf32>, vector<2x16x16xf32> -> vector<2x16x16xf32>
    "tpu.trace_stop"() : () -> ()
    %cst_22 = arith.constant dense<0xFF800000> : vector<2x16xf32>
    %39 = vector.multi_reduction <maximumf>, %38, %cst_22 [2] : vector<2x16x16xf32> to vector<2x16xf32>
    %40 = vector.shape_cast %39 : vector<2x16xf32> to vector<2x16x1xf32>
    %41 = vector.broadcast %40 : vector<2x16x1xf32> to vector<2x16x16xf32>
    %42 = arith.subf %38, %41 : vector<2x16x16xf32>
    %43 = math.exp %42 : vector<2x16x16xf32>
    %cst_23 = arith.constant dense<0.000000e+00> : vector<2x16xf32>
    %44 = vector.multi_reduction <add>, %43, %cst_23 [2] : vector<2x16x16xf32> to vector<2x16xf32>
    %45 = vector.shape_cast %44 : vector<2x16xf32> to vector<2x16x1xf32>
    %46 = tpu.reciprocal %45 {approx = true} : vector<2x16x1xf32> -> vector<2x16x1xf32>
    %47 = vector.broadcast %46 : vector<2x16x1xf32> to vector<2x16x16xf32>
    %48 = arith.mulf %43, %47 : vector<2x16x16xf32>
    "tpu.trace_start"() <{level = 10 : i32, message = "nqk,nkd->nqd"}> : () -> ()
    %cst_24 = arith.constant dense<0.000000e+00> : vector<2x16x8xf32>
    %49 = tpu.matmul %48, %37, %cst_24 {dimension_numbers = #tpu.dot_dimension_numbers<[2], [1], [1], [2], [0, 0, 0, 1, 1, 2], [0], [0]>} : vector<2x16x16xf32>, vector<2x16x8xf32>, vector<2x16x8xf32> -> vector<2x16x8xf32>
    "tpu.trace_stop"() : () -> ()
    %50 = vector.shape_cast %49 : vector<2x16x8xf32> to vector<32x8xf32>
    %c1 = arith.constant 1 : index
    %c0_25 = arith.constant 0 : index
    %c0_26 = arith.constant 0 : index
    %51 = vector.load %arg5[%c1, %c0_25, %c0_26] : memref<4x8x32xf32, #tpu.memory_space<vmem>>, vector<1x8x32xf32>
    %52 = vector.shape_cast %51 : vector<1x8x32xf32> to vector<8x32xf32>
    %cst_27 = arith.constant dense<0.000000e+00> : vector<32x32xf32>
    %53 = tpu.matmul %50, %52, %cst_27 {dimension_numbers = #tpu.dot_dimension_numbers<[1], [0], [0], [1], [0, 0, 1, 1], [], []>} : vector<32x8xf32>, vector<8x32xf32>, vector<32x32xf32> -> vector<32x32xf32>
    %54 = arith.addf %34, %53 : vector<32x32xf32>
    %55 = vector.extract_strided_slice %12 {offsets = [0, 0, 16], sizes = [2, 16, 8], strides = [1, 1, 1]} : vector<2x16x32xf32> to vector<2x16x8xf32>
    %56 = vector.extract_strided_slice %13 {offsets = [0, 0, 16], sizes = [2, 16, 8], strides = [1, 1, 1]} : vector<2x16x64xf32> to vector<2x16x8xf32>
    %57 = vector.extract_strided_slice %13 {offsets = [0, 0, 48], sizes = [2, 16, 8], strides = [1, 1, 1]} : vector<2x16x64xf32> to vector<2x16x8xf32>
    "tpu.trace_start"() <{level = 10 : i32, message = "nqd,nkd->nqk"}> : () -> ()
    %cst_28 = arith.constant dense<0.000000e+00> : vector<2x16x16xf32>
    %58 = tpu.matmul %55, %56, %cst_28 {dimension_numbers = #tpu.dot_dimension_numbers<[2], [2], [1], [1], [0, 0, 0, 1, 1, 1], [0], [0]>} : vector<2x16x8xf32>, vector<2x16x8xf32>, vector<2x16x16xf32> -> vector<2x16x16xf32>
    "tpu.trace_stop"() : () -> ()
    %cst_29 = arith.constant dense<0xFF800000> : vector<2x16xf32>
    %59 = vector.multi_reduction <maximumf>, %58, %cst_29 [2] : vector<2x16x16xf32> to vector<2x16xf32>
    %60 = vector.shape_cast %59 : vector<2x16xf32> to vector<2x16x1xf32>
    %61 = vector.broadcast %60 : vector<2x16x1xf32> to vector<2x16x16xf32>
    %62 = arith.subf %58, %61 : vector<2x16x16xf32>
    %63 = math.exp %62 : vector<2x16x16xf32>
    %cst_30 = arith.constant dense<0.000000e+00> : vector<2x16xf32>
    %64 = vector.multi_reduction <add>, %63, %cst_30 [2] : vector<2x16x16xf32> to vector<2x16xf32>
    %65 = vector.shape_cast %64 : vector<2x16xf32> to vector<2x16x1xf32>
    %66 = tpu.reciprocal %65 {approx = true} : vector<2x16x1xf32> -> vector<2x16x1xf32>
    %67 = vector.broadcast %66 : vector<2x16x1xf32> to vector<2x16x16xf32>
    %68 = arith.mulf %63, %67 : vector<2x16x16xf32>
    "tpu.trace_start"() <{level = 10 : i32, message = "nqk,nkd->nqd"}> : () -> ()
    %cst_31 = arith.constant dense<0.000000e+00> : vector<2x16x8xf32>
    %69 = tpu.matmul %68, %57, %cst_31 {dimension_numbers = #tpu.dot_dimension_numbers<[2], [1], [1], [2], [0, 0, 0, 1, 1, 2], [0], [0]>} : vector<2x16x16xf32>, vector<2x16x8xf32>, vector<2x16x8xf32> -> vector<2x16x8xf32>
    "tpu.trace_stop"() : () -> ()
    %70 = vector.shape_cast %69 : vector<2x16x8xf32> to vector<32x8xf32>
    %c2 = arith.constant 2 : index
    %c0_32 = arith.constant 0 : index
    %c0_33 = arith.constant 0 : index
    %71 = vector.load %arg5[%c2, %c0_32, %c0_33] : memref<4x8x32xf32, #tpu.memory_space<vmem>>, vector<1x8x32xf32>
    %72 = vector.shape_cast %71 : vector<1x8x32xf32> to vector<8x32xf32>
    %cst_34 = arith.constant dense<0.000000e+00> : vector<32x32xf32>
    %73 = tpu.matmul %70, %72, %cst_34 {dimension_numbers = #tpu.dot_dimension_numbers<[1], [0], [0], [1], [0, 0, 1, 1], [], []>} : vector<32x8xf32>, vector<8x32xf32>, vector<32x32xf32> -> vector<32x32xf32>
    %74 = arith.addf %54, %73 : vector<32x32xf32>
    %75 = vector.extract_strided_slice %12 {offsets = [0, 0, 24], sizes = [2, 16, 8], strides = [1, 1, 1]} : vector<2x16x32xf32> to vector<2x16x8xf32>
    %76 = vector.extract_strided_slice %13 {offsets = [0, 0, 24], sizes = [2, 16, 8], strides = [1, 1, 1]} : vector<2x16x64xf32> to vector<2x16x8xf32>
    %77 = vector.extract_strided_slice %13 {offsets = [0, 0, 56], sizes = [2, 16, 8], strides = [1, 1, 1]} : vector<2x16x64xf32> to vector<2x16x8xf32>
    "tpu.trace_start"() <{level = 10 : i32, message = "nqd,nkd->nqk"}> : () -> ()
    %cst_35 = arith.constant dense<0.000000e+00> : vector<2x16x16xf32>
    %78 = tpu.matmul %75, %76, %cst_35 {dimension_numbers = #tpu.dot_dimension_numbers<[2], [2], [1], [1], [0, 0, 0, 1, 1, 1], [0], [0]>} : vector<2x16x8xf32>, vector<2x16x8xf32>, vector<2x16x16xf32> -> vector<2x16x16xf32>
    "tpu.trace_stop"() : () -> ()
    %cst_36 = arith.constant dense<0xFF800000> : vector<2x16xf32>
    %79 = vector.multi_reduction <maximumf>, %78, %cst_36 [2] : vector<2x16x16xf32> to vector<2x16xf32>
    %80 = vector.shape_cast %79 : vector<2x16xf32> to vector<2x16x1xf32>
    %81 = vector.broadcast %80 : vector<2x16x1xf32> to vector<2x16x16xf32>
    %82 = arith.subf %78, %81 : vector<2x16x16xf32>
    %83 = math.exp %82 : vector<2x16x16xf32>
    %cst_37 = arith.constant dense<0.000000e+00> : vector<2x16xf32>
    %84 = vector.multi_reduction <add>, %83, %cst_37 [2] : vector<2x16x16xf32> to vector<2x16xf32>
    %85 = vector.shape_cast %84 : vector<2x16xf32> to vector<2x16x1xf32>
    %86 = tpu.reciprocal %85 {approx = true} : vector<2x16x1xf32> -> vector<2x16x1xf32>
    %87 = vector.broadcast %86 : vector<2x16x1xf32> to vector<2x16x16xf32>
    %88 = arith.mulf %83, %87 : vector<2x16x16xf32>
    "tpu.trace_start"() <{level = 10 : i32, message = "nqk,nkd->nqd"}> : () -> ()
    %cst_38 = arith.constant dense<0.000000e+00> : vector<2x16x8xf32>
    %89 = tpu.matmul %88, %77, %cst_38 {dimension_numbers = #tpu.dot_dimension_numbers<[2], [1], [1], [2], [0, 0, 0, 1, 1, 2], [0], [0]>} : vector<2x16x16xf32>, vector<2x16x8xf32>, vector<2x16x8xf32> -> vector<2x16x8xf32>
    "tpu.trace_stop"() : () -> ()
    %90 = vector.shape_cast %89 : vector<2x16x8xf32> to vector<32x8xf32>
    %c3 = arith.constant 3 : index
    %c0_39 = arith.constant 0 : index
    %c0_40 = arith.constant 0 : index
    %91 = vector.load %arg5[%c3, %c0_39, %c0_40] : memref<4x8x32xf32, #tpu.memory_space<vmem>>, vector<1x8x32xf32>
    %92 = vector.shape_cast %91 : vector<1x8x32xf32> to vector<8x32xf32>
    %cst_41 = arith.constant dense<0.000000e+00> : vector<32x32xf32>
    %93 = tpu.matmul %90, %92, %cst_41 {dimension_numbers = #tpu.dot_dimension_numbers<[1], [0], [0], [1], [0, 0, 1, 1], [], []>} : vector<32x8xf32>, vector<8x32xf32>, vector<32x32xf32> -> vector<32x32xf32>
    %94 = arith.addf %74, %93 : vector<32x32xf32>
    %c0_42 = arith.constant 0 : index
    %c0_43 = arith.constant 0 : index
    %95 = vector.load %arg8[%c0_42, %c0_43] : memref<1x32xf32, #tpu.memory_space<vmem>>, vector<1x32xf32>
    %96 = vector.broadcast %95 : vector<1x32xf32> to vector<32x32xf32>
    %97 = arith.addf %94, %96 : vector<32x32xf32>
    %c0_44 = arith.constant 0 : index
    %c0_45 = arith.constant 0 : index
    %98 = vector.load %arg9[%c0_44, %c0_45] : memref<32x32xf32, #tpu.memory_space<vmem>>, vector<32x32xf32>
    tpu.vector_store %arg9[%c0_44, %c0_45], %97 {strides = array<i32>} : memref<32x32xf32, #tpu.memory_space<vmem>>, vector<32x32xf32>,
    return
  }
  func.func @transform_0(%arg0: i32) -> (i32, i32) {
    %c0_i32 = arith.constant 0 : i32
    %c0_i32_0 = arith.constant 0 : i32
    %c0_i32_1 = arith.constant 0 : i32
    return %c0_i32, %c0_i32_0 : i32, i32
  }
  func.func @transform_1(%arg0: i32) -> (i32, i32) {
    %c0_i32 = arith.constant 0 : i32
    %c0_i32_0 = arith.constant 0 : i32
    %c0_i32_1 = arith.constant 0 : i32
    return %c0_i32, %c0_i32_0 : i32, i32
  }
  func.func @transform_2(%arg0: i32) -> (i32, i32) {
    %c0_i32 = arith.constant 0 : i32
    %c0_i32_0 = arith.constant 0 : i32
    %c0_i32_1 = arith.constant 0 : i32
    return %c0_i32, %c0_i32_0 : i32, i32
  }
  func.func @transform_3(%arg0: i32) -> (i32, i32) {
    %c0_i32 = arith.constant 0 : i32
    %c0_i32_0 = arith.constant 0 : i32
    %c0_i32_1 = arith.constant 0 : i32
    return %c0_i32, %c0_i32_0 : i32, i32
  }
  func.func @transform_4(%arg0: i32) -> (i32, i32, i32) {
    %c0_i32 = arith.constant 0 : i32
    %c0_i32_0 = arith.constant 0 : i32
    %c0_i32_1 = arith.constant 0 : i32
    %c0_i32_2 = arith.constant 0 : i32
    return %c0_i32, %c0_i32_0, %c0_i32_1 : i32, i32, i32
  }
  func.func @transform_5(%arg0: i32) -> (i32, i32) {
    %c0_i32 = arith.constant 0 : i32
    %c0_i32_0 = arith.constant 0 : i32
    %c0_i32_1 = arith.constant 0 : i32
    return %c0_i32, %c0_i32_0 : i32, i32
  }
  func.func @transform_6(%arg0: i32) -> (i32, i32) {
    %c0_i32 = arith.constant 0 : i32
    %c0_i32_0 = arith.constant 0 : i32
    %c0_i32_1 = arith.constant 0 : i32
    return %c0_i32, %c0_i32_0 : i32, i32
  }
  func.func @transform_7(%arg0: i32) -> (i32, i32) {
    %c0_i32 = arith.constant 0 : i32
    %c0_i32_0 = arith.constant 0 : i32
    %c0_i32_1 = arith.constant 0 : i32
    return %c0_i32, %c0_i32_0 : i32, i32
  }
  func.func @transform_8(%arg0: i32) -> (i32, i32) {
    %c0_i32 = arith.constant 0 : i32
    %c0_i32_0 = arith.constant 0 : i32
    %c0_i32_1 = arith.constant 0 : i32
    return %c0_i32, %c0_i32_0 : i32, i32
  }
}

</mosaic_0001>

<llo_original>
// kernel: tpu_custom_call.1
$region0: #{tpu_custom_call.1}
  #allocation0 [shape = 'u32[]', space=smem, size = 0x4, offset = 0x4, fixed_abs, tag = 'smem constant byte address 0x4 - core index']
  #allocation1 [shape = 'u32[144,128]{1,0:T(1,128)}', space=vmem, size = 0x12000, scoped, tag = 'internal scratch']
  %s0 = inlined_call_operand.hbm [shape: f32[32,32], index: 0, kind: input, shape index: {}]
  %s1 = inlined_call_operand.hbm [shape: f32[32,32], index: 1, kind: input, shape index: {}]
  %s2 = inlined_call_operand.hbm [shape: f32[32,32], index: 2, kind: input, shape index: {}]
  %s3 = inlined_call_operand.hbm [shape: f32[32,64], index: 3, kind: input, shape index: {}]
  %s4 = inlined_call_operand.hbm [shape: f32[4,8,32], index: 4, kind: input, shape index: {}]
  %s5 = inlined_call_operand.vmem [shape: f32[1,32], index: 5, kind: input, shape index: {}]
  %s6 = inlined_call_operand.vmem [shape: f32[1,64], index: 6, kind: input, shape index: {}]
  %s7 = inlined_call_operand.vmem [shape: f32[1,32], index: 7, kind: input, shape index: {}]
  %s8 = inlined_call_operand.hbm [shape: f32[32,32], index: 8, kind: output, shape index: {}]
  %s9 = sld [smem:[#allocation0]]
  $region62: #{tpu_custom_call.1} parent=0
    _
  %s11 = ssub.s32 1, %s9
  %s12 = scalar_select 0, %s11, %s9
  $region1: #{tpu_custom_call.1} parent=0
    #allocation2 [shape = 'u8[16384]{0}', space=vmem, size = 0x4000, scoped, tag = 'input window, operand 0, single buffered']
    #allocation3 [shape = 's32[1]{0}', space=sflag, size = 0x4, scoped, tag = 'scoped memory for tpu_custom_call.1']
    #allocation4 [shape = 's32[1]{0}', space=sflag, size = 0x4, scoped, tag = 'scoped memory for tpu_custom_call.1']
    #allocation5 [shape = 'u8[16384]{0}', space=vmem, size = 0x4000, scoped, tag = 'input window, operand 1, single buffered']
    #allocation6 [shape = 's32[1]{0}', space=sflag, size = 0x4, scoped, tag = 'scoped memory for tpu_custom_call.1']
    #allocation7 [shape = 'u8[16384]{0}', space=vmem, size = 0x4000, scoped, tag = 'input window, operand 2, single buffered']
    #allocation8 [shape = 'u8[16384]{0}', space=vmem, size = 0x4000, scoped, tag = 'input window, operand 3, single buffered']
    #allocation9 [shape = 's32[1]{0}', space=sflag, size = 0x4, scoped, tag = 'scoped memory for tpu_custom_call.1']
    #allocation10 [shape = 'u8[16384]{0}', space=vmem, size = 0x4000, scoped, tag = 'input window, operand 4, single buffered']
    #allocation11 [shape = 'u8[16384]{0}', space=vmem, size = 0x4000, scoped, tag = 'output window, operand 0, single buffered']
    %13 = vsyncpa [#allocation3], 0
    %14 = vsyncpa [#allocation6], 0
    %15 = vsyncpa [#allocation9], 0
    %16 = vsyncpa [#allocation4], 0
    // Predicated region
    $region2: #{tpu_custom_call.1} parent=1 // pred_check
      _
    $region3: #{tpu_custom_call.1} parent=1 // pred_check_branch
      %18 = sbr.rel (0) target = $region5
    $region4: #{tpu_custom_call.1} parent=1 // pred_region
      %s20 = ssub.s32 512, 512
      %21 = vsyncadd [#allocation3], %s20
      %s22 = sshll.u32 [#allocation2], 4
      %s23 = int_to_ptr.vmem [resolvable:$true] %s22
      %28 = dma.hbm_to_vmem [thread:$0]  %s0, 512, %s23, [#allocation3], 128, 128, 8
    $region5: #{tpu_custom_call.1} parent=1 // pred_fallthru
      _
    // Predicated region
    $region6: #{tpu_custom_call.1} parent=1 // pred_check
      _
    $region7: #{tpu_custom_call.1} parent=1 // pred_check_branch
      %30 = sbr.rel (0) target = $region9
    $region8: #{tpu_custom_call.1} parent=1 // pred_region
      %s32 = ssub.s32 512, 512
      %33 = vsyncadd [#allocation6], %s32
      %s34 = sshll.u32 [#allocation5], 4
      %s35 = int_to_ptr.vmem [resolvable:$true] %s34
      %40 = dma.hbm_to_vmem [thread:$0]  %s1, 512, %s35, [#allocation6], 128, 128, 8
    $region9: #{tpu_custom_call.1} parent=1 // pred_fallthru
      _
    // Predicated region
    $region10: #{tpu_custom_call.1} parent=1 // pred_check
      _
    $region11: #{tpu_custom_call.1} parent=1 // pred_check_branch
      %42 = sbr.rel (0) target = $region13
    $region12: #{tpu_custom_call.1} parent=1 // pred_region
      %s44 = ssub.s32 512, 512
      %45 = vsyncadd [#allocation6], %s44
      %s46 = sshll.u32 [#allocation7], 4
      %s47 = int_to_ptr.vmem [resolvable:$true] %s46
      %52 = dma.hbm_to_vmem [thread:$0]  %s2, 512, %s47, [#allocation6], 128, 128, 8
    $region13: #{tpu_custom_call.1} parent=1 // pred_fallthru
      _
    // Predicated region
    $region14: #{tpu_custom_call.1} parent=1 // pred_check
      _
    $region15: #{tpu_custom_call.1} parent=1 // pred_check_branch
      %54 = sbr.rel (0) target = $region17
    $region16: #{tpu_custom_call.1} parent=1 // pred_region
      %s56 = ssub.s32 512, 512
      %57 = vsyncadd [#allocation9], %s56
      %s58 = sshll.u32 [#allocation8], 4
      %s59 = int_to_ptr.vmem [resolvable:$true] %s58
      %64 = dma.hbm_to_vmem [thread:$0]  %s3, 512, %s59, [#allocation9], 128, 128, 8
    $region17: #{tpu_custom_call.1} parent=1 // pred_fallthru
      _
    // Predicated region
    $region18: #{tpu_custom_call.1} parent=1 // pred_check
      _
    $region19: #{tpu_custom_call.1} parent=1 // pred_check_branch
      %66 = sbr.rel (0) target = $region21
    $region20: #{tpu_custom_call.1} parent=1 // pred_region
      %s68 = ssub.s32 512, 512
      %69 = vsyncadd [#allocation9], %s68
      %s70 = sshll.u32 [#allocation10], 4
      %s71 = int_to_ptr.vmem [resolvable:$true] %s70
      %76 = dma.hbm_to_vmem [thread:$0]  %s4, 512, %s71, [#allocation9], 128, 128, 8
    $region21: #{tpu_custom_call.1} parent=1 // pred_fallthru
      _
    // Predicated region
    $region22: #{tpu_custom_call.1} parent=1 // pred_check
      _
    $region23: #{tpu_custom_call.1} parent=1 // pred_check_branch
      %78 = sbr.rel (0) target = $region25
    $region24: #{tpu_custom_call.1} parent=1 // pred_region
      _
    $region25: #{tpu_custom_call.1} parent=1 // pred_fallthru
      _
    // Predicated region
    $region26: #{tpu_custom_call.1} parent=1 // pred_check
      _
    $region27: #{tpu_custom_call.1} parent=1 // pred_check_branch
      %80 = sbr.rel (0) target = $region29
    $region28: #{tpu_custom_call.1} parent=1 // pred_region
      _
    $region29: #{tpu_custom_call.1} parent=1 // pred_fallthru
      _
    // Predicated region
    $region30: #{tpu_custom_call.1} parent=1 // pred_check
      _
    $region31: #{tpu_custom_call.1} parent=1 // pred_check_branch
      %82 = sbr.rel (0) target = $region33
    $region32: #{tpu_custom_call.1} parent=1 // pred_region
      _
    $region33: #{tpu_custom_call.1} parent=1 // pred_fallthru
      _
    // Predicated region
    $region34: #{tpu_custom_call.1} parent=1 // pred_check
      _
    $region35: #{tpu_custom_call.1} parent=1 // pred_check_branch
      %84 = sbr.rel (0) target = $region37
    $region36: #{tpu_custom_call.1} parent=1 // pred_region
      %85 = dma.done [#allocation3], 512
    $region37: #{tpu_custom_call.1} parent=1 // pred_fallthru
      _
    // Predicated region
    $region38: #{tpu_custom_call.1} parent=1 // pred_check
      _
    $region39: #{tpu_custom_call.1} parent=1 // pred_check_branch
      %87 = sbr.rel (0) target = $region41
    $region40: #{tpu_custom_call.1} parent=1 // pred_region
      %88 = dma.done [#allocation6], 512
    $region41: #{tpu_custom_call.1} parent=1 // pred_fallthru
      _
    // Predicated region
    $region42: #{tpu_custom_call.1} parent=1 // pred_check
      _
    $region43: #{tpu_custom_call.1} parent=1 // pred_check_branch
      %90 = sbr.rel (0) target = $region45
    $region44: #{tpu_custom_call.1} parent=1 // pred_region
      %91 = dma.done [#allocation6], 512
    $region45: #{tpu_custom_call.1} parent=1 // pred_fallthru
      _
    // Predicated region
    $region46: #{tpu_custom_call.1} parent=1 // pred_check
      _
    $region47: #{tpu_custom_call.1} parent=1 // pred_check_branch
      %93 = sbr.rel (0) target = $region49
    $region48: #{tpu_custom_call.1} parent=1 // pred_region
      %94 = dma.done [#allocation9], 512
    $region49: #{tpu_custom_call.1} parent=1 // pred_fallthru
      _
    // Predicated region
    $region50: #{tpu_custom_call.1} parent=1 // pred_check
      _
    $region51: #{tpu_custom_call.1} parent=1 // pred_check_branch
      %96 = sbr.rel (0) target = $region53
    $region52: #{tpu_custom_call.1} parent=1 // pred_region
      %97 = dma.done [#allocation9], 512
    $region53: #{tpu_custom_call.1} parent=1 // pred_fallthru
      _
    %v98 = vld [vmem:[#allocation2] sm:$0xff]
    %v99 = vld [vmem:[#allocation2 + $0x8] sm:$0xff]
    %v100 = vld [vmem:[#allocation2 + $0x10] sm:$0xff]
    %v101 = vld [vmem:[#allocation2 + $0x18] sm:$0xff]
    %v102 = vld [vmem:[#allocation5] sm:$0xff]
    %v103 = vld [vmem:[#allocation5 + $0x8] sm:$0xff]
    %v104 = vld [vmem:[#allocation5 + $0x10] sm:$0xff]
    %v105 = vld [vmem:[#allocation5 + $0x18] sm:$0xff]
    %v106 = vld [vmem:[#allocation7] sm:$0xff]
    %v107 = vld [vmem:[#allocation7 + $0x8] sm:$0xff]
    %v108 = vld [vmem:[#allocation7 + $0x10] sm:$0xff]
    %v109 = vld [vmem:[#allocation7 + $0x18] sm:$0xff]
    %v110 = vld [vmem:[%s5] sm:$0x1]
    %v112 = vlaneseq
    %v113 = vshrl.u32 %v112, 7
    %v114 = vsub.s32 0, %v113
    %v115 = vrot.slane %v110, %v114
    %vm117 = vcmask 261120
    %v119 = vsel %vm117, %v98, 0
    %v122 = vsel %vm117, %v99, 0
    %v125 = vsel %vm117, %v100, 0
    %v128 = vsel %vm117, %v101, 0
    %130 = vmatprep.subr.mxu0 0.0
    %131 = vmatpush1.msra.mxu0 %v106
    %132 = vmatprep.subr.mxu0 0.0
    %133 = vmatpush1.msra.mxu0 %v107
    %134 = vmatprep.subr.mxu0 0.0
    %135 = vmatpush1.msra.mxu0 %v108
    %136 = vmatprep.subr.mxu0 0.0
    %137 = vmatpush1.msra.mxu0 %v109
    %138 = vmatprep.subr.mxu0 0.0
    %139 = vmatpush1.msra.mxu0 0.0
    %140 = vmatprep.subr.mxu0 0.0
    %141 = vmatpush1.msra.mxu0 0.0
    %142 = vmatprep.subr.mxu0 0.0
    %143 = vmatpush1.msra.mxu0 0.0
    %144 = vmatprep.subr.mxu0 0.0
    %145 = vmatpush1.msra.mxu0 0.0
    %146 = vmatprep.subr.mxu0 0.0
    %147 = vmatpush1.msra.mxu0 0.0
    %148 = vmatprep.subr.mxu0 0.0
    %149 = vmatpush1.msra.mxu0 0.0
    %150 = vmatprep.subr.mxu0 0.0
    %151 = vmatpush1.msra.mxu0 0.0
    %152 = vmatprep.subr.mxu0 0.0
    %153 = vmatpush1.msra.mxu0 0.0
    %154 = vmatprep.subr.mxu0 0.0
    %155 = vmatpush1.msra.mxu0 0.0
    %156 = vmatprep.subr.mxu0 0.0
    %157 = vmatpush1.msra.mxu0 0.0
    %158 = vmatprep.subr.mxu0 0.0
    %159 = vmatpush1.msra.mxu0 0.0
    %160 = vmatprep.subr.mxu0 0.0
    %161 = vmatpush1.msra.mxu0 0.0
    %162 = vmatprep.subr.mxu0 0.0
    %163 = vmatpush1.msra.mxu0 0.0
    %164 = vmatprep.subr.mxu0 0.0
    %165 = vmatpush1.msra.mxu0 0.0
    %166 = vmatprep.subr.mxu0 0.0
    %167 = vmatpush1.msra.mxu0 0.0
    %168 = vmatprep.subr.mxu0 0.0
    %169 = vmatpush1.msra.mxu0 0.0
    %170 = vmatprep.subr.mxu0 0.0
    %171 = vmatpush1.msra.mxu0 0.0
    %172 = vmatprep.subr.mxu0 0.0
    %173 = vmatpush1.msra.mxu0 0.0
    %174 = vmatprep.subr.mxu0 0.0
    %175 = vmatpush1.msra.mxu0 0.0
    %176 = vmatprep.subr.mxu0 0.0
    %177 = vmatpush1.msra.mxu0 0.0
    %178 = vmatprep.subr.mxu0 0.0
    %179 = vmatpush1.msra.mxu0 0.0
    %180 = vmatprep.subr.mxu0 0.0
    %181 = vmatpush1.msra.mxu0 0.0
    %182 = vmatprep.subr.mxu0 0.0
    %183 = vmatpush1.msra.mxu0 0.0
    %184 = vmatprep.subr.mxu0 0.0
    %185 = vmatpush1.msra.mxu0 0.0
    %186 = vmatprep.subr.mxu0 0.0
    %187 = vmatpush1.msra.mxu0 0.0
    %188 = vmatprep.subr.mxu0 0.0
    %189 = vmatpush1.msra.mxu0 0.0
    %190 = vmatprep.subr.mxu0 0.0
    %191 = vmatpush1.msra.mxu0 0.0
    %192 = vmatprep.subr.mxu0 0.0
    %193 = vmatpush1.msra.mxu0 0.0
    %194 = vmatprep.mubr.f32.mxu0 0.0
    %195 = vmatmul.mubr.f32.gmra.mrb[0].mxu0 %v119
    %v196 = vpop.f32.mrb[0].mxu0
    %v197 = vadd.f32 %v115, %v196
    %v198 = vpop.f32.mrb[0].mxu0
    %199 = vmatprep.mubr.f32.mxu0 0.0
    %200 = vmatmul.mubr.f32.gmra.mrb[0].mxu0 %v122
    %v201 = vpop.f32.mrb[0].mxu0
    %v202 = vadd.f32 %v115, %v201
    %v203 = vpop.f32.mrb[0].mxu0
    %204 = vmatprep.mubr.f32.mxu0 0.0
    %205 = vmatmul.mubr.f32.gmra.mrb[0].mxu0 %v125
    %v206 = vpop.f32.mrb[0].mxu0
    %v207 = vadd.f32 %v115, %v206
    %v208 = vpop.f32.mrb[0].mxu0
    %209 = vmatprep.mubr.f32.mxu0 0.0
    %210 = vmatmul.mubr.f32.gmra.mrb[0].mxu0 %v128
    %v211 = vpop.f32.mrb[0].mxu0
    %v212 = vadd.f32 %v115, %v211
    %v213 = vpop.f32.mrb[0].mxu0
    %214 = vdwg.mxu0
    %v215 = vld [vmem:[#allocation8] sm:$0xff]
    %v216 = vld [vmem:[#allocation8 + $0x8] sm:$0xff]
    %v217 = vld [vmem:[#allocation8 + $0x10] sm:$0xff]
    %v218 = vld [vmem:[#allocation8 + $0x18] sm:$0xff]
    %v219 = vld [vmem:[%s6] sm:$0x1]
    %v221 = vlaneseq
    %v222 = vshrl.u32 %v221, 7
    %v223 = vsub.s32 0, %v222
    %v224 = vrot.slane %v219, %v223
    %v227 = vsel %vm117, %v102, 0
    %v230 = vsel %vm117, %v103, 0
    %v233 = vsel %vm117, %v104, 0
    %v236 = vsel %vm117, %v105, 0
    %238 = vmatprep.subr.mxu0 0.0
    %239 = vmatpush1.msra.mxu0 %v215
    %240 = vmatprep.subr.mxu0 0.0
    %241 = vmatpush1.msra.mxu0 %v216
    %242 = vmatprep.subr.mxu0 0.0
    %243 = vmatpush1.msra.mxu0 %v217
    %244 = vmatprep.subr.mxu0 0.0
    %245 = vmatpush1.msra.mxu0 %v218
    %246 = vmatprep.subr.mxu0 0.0
    %247 = vmatpush1.msra.mxu0 0.0
    %248 = vmatprep.subr.mxu0 0.0
    %249 = vmatpush1.msra.mxu0 0.0
    %250 = vmatprep.subr.mxu0 0.0
    %251 = vmatpush1.msra.mxu0 0.0
    %252 = vmatprep.subr.mxu0 0.0
    %253 = vmatpush1.msra.mxu0 0.0
    %254 = vmatprep.subr.mxu0 0.0
    %255 = vmatpush1.msra.mxu0 0.0
    %256 = vmatprep.subr.mxu0 0.0
    %257 = vmatpush1.msra.mxu0 0.0
    %258 = vmatprep.subr.mxu0 0.0
    %259 = vmatpush1.msra.mxu0 0.0
    %260 = vmatprep.subr.mxu0 0.0
    %261 = vmatpush1.msra.mxu0 0.0
    %262 = vmatprep.subr.mxu0 0.0
    %263 = vmatpush1.msra.mxu0 0.0
    %264 = vmatprep.subr.mxu0 0.0
    %265 = vmatpush1.msra.mxu0 0.0
    %266 = vmatprep.subr.mxu0 0.0
    %267 = vmatpush1.msra.mxu0 0.0
    %268 = vmatprep.subr.mxu0 0.0
    %269 = vmatpush1.msra.mxu0 0.0
    %270 = vmatprep.subr.mxu0 0.0
    %271 = vmatpush1.msra.mxu0 0.0
    %272 = vmatprep.subr.mxu0 0.0
    %273 = vmatpush1.msra.mxu0 0.0
    %274 = vmatprep.subr.mxu0 0.0
    %275 = vmatpush1.msra.mxu0 0.0
    %276 = vmatprep.subr.mxu0 0.0
    %277 = vmatpush1.msra.mxu0 0.0
    %278 = vmatprep.subr.mxu0 0.0
    %279 = vmatpush1.msra.mxu0 0.0
    %280 = vmatprep.subr.mxu0 0.0
    %281 = vmatpush1.msra.mxu0 0.0
    %282 = vmatprep.subr.mxu0 0.0
    %283 = vmatpush1.msra.mxu0 0.0
    %284 = vmatprep.subr.mxu0 0.0
    %285 = vmatpush1.msra.mxu0 0.0
    %286 = vmatprep.subr.mxu0 0.0
    %287 = vmatpush1.msra.mxu0 0.0
    %288 = vmatprep.subr.mxu0 0.0
    %289 = vmatpush1.msra.mxu0 0.0
    %290 = vmatprep.subr.mxu0 0.0
    %291 = vmatpush1.msra.mxu0 0.0
    %292 = vmatprep.subr.mxu0 0.0
    %293 = vmatpush1.msra.mxu0 0.0
    %294 = vmatprep.subr.mxu0 0.0
    %295 = vmatpush1.msra.mxu0 0.0
    %296 = vmatprep.subr.mxu0 0.0
    %297 = vmatpush1.msra.mxu0 0.0
    %298 = vmatprep.subr.mxu0 0.0
    %299 = vmatpush1.msra.mxu0 0.0
    %300 = vmatprep.subr.mxu0 0.0
    %301 = vmatpush1.msra.mxu0 0.0
    %302 = vmatprep.mubr.f32.mxu0 0.0
    %303 = vmatmul.mubr.f32.gmra.mrb[0].mxu0 %v227
    %v304 = vpop.f32.mrb[0].mxu0
    %v305 = vadd.f32 %v224, %v304
    %v306 = vpop.f32.mrb[0].mxu0
    %307 = vmatprep.mubr.f32.mxu0 0.0
    %308 = vmatmul.mubr.f32.gmra.mrb[0].mxu0 %v230
    %v309 = vpop.f32.mrb[0].mxu0
    %v310 = vadd.f32 %v224, %v309
    %v311 = vpop.f32.mrb[0].mxu0
    %312 = vmatprep.mubr.f32.mxu0 0.0
    %313 = vmatmul.mubr.f32.gmra.mrb[0].mxu0 %v233
    %v314 = vpop.f32.mrb[0].mxu0
    %v315 = vadd.f32 %v224, %v314
    %v316 = vpop.f32.mrb[0].mxu0
    %317 = vmatprep.mubr.f32.mxu0 0.0
    %318 = vmatmul.mubr.f32.gmra.mrb[0].mxu0 %v236
    %v319 = vpop.f32.mrb[0].mxu0
    %v320 = vadd.f32 %v224, %v319
    %v321 = vpop.f32.mrb[0].mxu0
    %322 = vdwg.mxu0
    %vm323 = vcmask 64512
    %v325 = vsel %vm323, %v197, 0
    %v328 = vsel %vm323, %v202, 0
    %v331 = vsel %vm323, %v305, 0
    %v334 = vsel %vm323, %v310, 0
    %336 = vmatprep.subr.mxu0 0.0
    %337 = vmatpush1.xpose.msra.mxu0 %v331
    %338 = vmatprep.subr.mxu0 0.0
    %339 = vmatpush1.xpose.msra.mxu0 %v334
    %340 = vmatprep.subr.mxu0 0.0
    %341 = vmatpush1.xpose.msra.mxu0 0.0
    %342 = vmatprep.subr.mxu0 0.0
    %343 = vmatpush1.xpose.msra.mxu0 0.0
    %344 = vmatprep.subr.mxu0 0.0
    %345 = vmatpush1.xpose.msra.mxu0 0.0
    %346 = vmatprep.subr.mxu0 0.0
    %347 = vmatpush1.xpose.msra.mxu0 0.0
    %348 = vmatprep.subr.mxu0 0.0
    %349 = vmatpush1.xpose.msra.mxu0 0.0
    %350 = vmatprep.subr.mxu0 0.0
    %351 = vmatpush1.xpose.msra.mxu0 0.0
    %352 = vmatprep.subr.mxu0 0.0
    %353 = vmatpush1.xpose.msra.mxu0 0.0
    %354 = vmatprep.subr.mxu0 0.0
    %355 = vmatpush1.xpose.msra.mxu0 0.0
    %356 = vmatprep.subr.mxu0 0.0
    %357 = vmatpush1.xpose.msra.mxu0 0.0
    %358 = vmatprep.subr.mxu0 0.0
    %359 = vmatpush1.xpose.msra.mxu0 0.0
    %360 = vmatprep.subr.mxu0 0.0
    %361 = vmatpush1.xpose.msra.mxu0 0.0
    %362 = vmatprep.subr.mxu0 0.0
    %363 = vmatpush1.xpose.msra.mxu0 0.0
    %364 = vmatprep.subr.mxu0 0.0
    %365 = vmatpush1.xpose.msra.mxu0 0.0
    %366 = vmatprep.subr.mxu0 0.0
    %367 = vmatpush1.xpose.msra.mxu0 0.0
    %368 = vmatprep.subr.mxu0 0.0
    %369 = vmatpush1.xpose.msra.mxu0 0.0
    %370 = vmatprep.subr.mxu0 0.0
    %371 = vmatpush1.xpose.msra.mxu0 0.0
    %372 = vmatprep.subr.mxu0 0.0
    %373 = vmatpush1.xpose.msra.mxu0 0.0
    %374 = vmatprep.subr.mxu0 0.0
    %375 = vmatpush1.xpose.msra.mxu0 0.0
    %376 = vmatprep.subr.mxu0 0.0
    %377 = vmatpush1.xpose.msra.mxu0 0.0
    %378 = vmatprep.subr.mxu0 0.0
    %379 = vmatpush1.xpose.msra.mxu0 0.0
    %380 = vmatprep.subr.mxu0 0.0
    %381 = vmatpush1.xpose.msra.mxu0 0.0
    %382 = vmatprep.subr.mxu0 0.0
    %383 = vmatpush1.xpose.msra.mxu0 0.0
    %384 = vmatprep.subr.mxu0 0.0
    %385 = vmatpush1.xpose.msra.mxu0 0.0
    %386 = vmatprep.subr.mxu0 0.0
    %387 = vmatpush1.xpose.msra.mxu0 0.0
    %388 = vmatprep.subr.mxu0 0.0
    %389 = vmatpush1.xpose.msra.mxu0 0.0
    %390 = vmatprep.subr.mxu0 0.0
    %391 = vmatpush1.xpose.msra.mxu0 0.0
    %392 = vmatprep.subr.mxu0 0.0
    %393 = vmatpush1.xpose.msra.mxu0 0.0
    %394 = vmatprep.subr.mxu0 0.0
    %395 = vmatpush1.xpose.msra.mxu0 0.0
    %396 = vmatprep.subr.mxu0 0.0
    %397 = vmatpush1.xpose.msra.mxu0 0.0
    %398 = vmatprep.subr.mxu0 0.0
    %399 = vmatpush1.xpose.msra.mxu0 0.0
    %400 = vmatprep.mubr.f32.mxu0 0.0
    %401 = vmatmul.mubr.f32.gmra.mrb[0].mxu0 %v325
    %v402 = vpop.f32.mrb[0].mxu0
    %v403 = vadd.f32 0.0, %v402
    %v404 = vpop.f32.mrb[0].mxu0
    %405 = vmatprep.mubr.f32.mxu0 0.0
    %406 = vmatmul.mubr.f32.gmra.mrb[0].mxu0 %v328
    %v407 = vpop.f32.mrb[0].mxu0
    %v408 = vadd.f32 0.0, %v407
    %v409 = vpop.f32.mrb[0].mxu0
    %410 = vdwg.mxu0
    %v412 = vsel %vm323, %v207, 0
    %v415 = vsel %vm323, %v212, 0
    %v418 = vsel %vm323, %v315, 0
    %v421 = vsel %vm323, %v320, 0
    %423 = vmatprep.subr.mxu0 0.0
    %424 = vmatpush1.xpose.msra.mxu0 %v418
    %425 = vmatprep.subr.mxu0 0.0
    %426 = vmatpush1.xpose.msra.mxu0 %v421
    %427 = vmatprep.subr.mxu0 0.0
    %428 = vmatpush1.xpose.msra.mxu0 0.0
    %429 = vmatprep.subr.mxu0 0.0
    %430 = vmatpush1.xpose.msra.mxu0 0.0
    %431 = vmatprep.subr.mxu0 0.0
    %432 = vmatpush1.xpose.msra.mxu0 0.0
    %433 = vmatprep.subr.mxu0 0.0
    %434 = vmatpush1.xpose.msra.mxu0 0.0
    %435 = vmatprep.subr.mxu0 0.0
    %436 = vmatpush1.xpose.msra.mxu0 0.0
    %437 = vmatprep.subr.mxu0 0.0
    %438 = vmatpush1.xpose.msra.mxu0 0.0
    %439 = vmatprep.subr.mxu0 0.0
    %440 = vmatpush1.xpose.msra.mxu0 0.0
    %441 = vmatprep.subr.mxu0 0.0
    %442 = vmatpush1.xpose.msra.mxu0 0.0
    %443 = vmatprep.subr.mxu0 0.0
    %444 = vmatpush1.xpose.msra.mxu0 0.0
    %445 = vmatprep.subr.mxu0 0.0
    %446 = vmatpush1.xpose.msra.mxu0 0.0
    %447 = vmatprep.subr.mxu0 0.0
    %448 = vmatpush1.xpose.msra.mxu0 0.0
    %449 = vmatprep.subr.mxu0 0.0
    %450 = vmatpush1.xpose.msra.mxu0 0.0
    %451 = vmatprep.subr.mxu0 0.0
    %452 = vmatpush1.xpose.msra.mxu0 0.0
    %453 = vmatprep.subr.mxu0 0.0
    %454 = vmatpush1.xpose.msra.mxu0 0.0
    %455 = vmatprep.subr.mxu0 0.0
    %456 = vmatpush1.xpose.msra.mxu0 0.0
    %457 = vmatprep.subr.mxu0 0.0
    %458 = vmatpush1.xpose.msra.mxu0 0.0
    %459 = vmatprep.subr.mxu0 0.0
    %460 = vmatpush1.xpose.msra.mxu0 0.0
    %461 = vmatprep.subr.mxu0 0.0
    %462 = vmatpush1.xpose.msra.mxu0 0.0
    %463 = vmatprep.subr.mxu0 0.0
    %464 = vmatpush1.xpose.msra.mxu0 0.0
    %465 = vmatprep.subr.mxu0 0.0
    %466 = vmatpush1.xpose.msra.mxu0 0.0
    %467 = vmatprep.subr.mxu0 0.0
    %468 = vmatpush1.xpose.msra.mxu0 0.0
    %469 = vmatprep.subr.mxu0 0.0
    %470 = vmatpush1.xpose.msra.mxu0 0.0
    %471 = vmatprep.subr.mxu0 0.0
    %472 = vmatpush1.xpose.msra.mxu0 0.0
    %473 = vmatprep.subr.mxu0 0.0
    %474 = vmatpush1.xpose.msra.mxu0 0.0
    %475 = vmatprep.subr.mxu0 0.0
    %476 = vmatpush1.xpose.msra.mxu0 0.0
    %477 = vmatprep.subr.mxu0 0.0
    %478 = vmatpush1.xpose.msra.mxu0 0.0
    %479 = vmatprep.subr.mxu0 0.0
    %480 = vmatpush1.xpose.msra.mxu0 0.0
    %481 = vmatprep.subr.mxu0 0.0
    %482 = vmatpush1.xpose.msra.mxu0 0.0
    %483 = vmatprep.subr.mxu0 0.0
    %484 = vmatpush1.xpose.msra.mxu0 0.0
    %485 = vmatprep.subr.mxu0 0.0
    %486 = vmatpush1.xpose.msra.mxu0 0.0
    %487 = vmatprep.mubr.f32.mxu0 0.0
    %488 = vmatmul.mubr.f32.gmra.mrb[0].mxu0 %v412
    %v489 = vpop.f32.mrb[0].mxu0
    %v490 = vadd.f32 0.0, %v489
    %v491 = vpop.f32.mrb[0].mxu0
    %492 = vmatprep.mubr.f32.mxu0 0.0
    %493 = vmatmul.mubr.f32.gmra.mrb[0].mxu0 %v415
    %v494 = vpop.f32.mrb[0].mxu0
    %v495 = vadd.f32 0.0, %v494
    %v496 = vpop.f32.mrb[0].mxu0
    %497 = vdwg.mxu0
    %vm498 = vcmask 130048
    %v499 = vsel %vm498, %v403, -inf
    %500 = vmax.xlane.f32.xlu0 %v499
    %v501 = vpop.xlane.xlu0 %500
    %v502 = vsel %vm498, %v408, -inf
    %503 = vmax.xlane.f32.xlu0 %v502
    %v504 = vpop.xlane.xlu0 %503
    %v505 = vsel %vm498, %v490, -inf
    %506 = vmax.xlane.f32.xlu0 %v505
    %v507 = vpop.xlane.xlu0 %506
    %v508 = vsel %vm498, %v495, -inf
    %509 = vmax.xlane.f32.xlu0 %v508
    %v510 = vpop.xlane.xlu0 %509
    %v511 = vsub.f32 %v403, %v501
    %v512 = vsub.f32 %v408, %v504
    %v513 = vsub.f32 %v490, %v507
    %v514 = vsub.f32 %v495, %v510
    %v515 = vmul.f32 %v511, 1.442695
    %v516 = vpow.pop %v515
    %v517 = vmul.f32 %v512, 1.442695
    %v518 = vpow.pop %v517
    %v519 = vmul.f32 %v513, 1.442695
    %v520 = vpow.pop %v519
    %v521 = vmul.f32 %v514, 1.442695
    %v522 = vpow.pop %v521
    %v523 = vsel %vm498, %v516, 0.0
    %524 = vadd.xlane.f32.xlu0 %v523
    %v525 = vpop.xlane.xlu0 %524
    %v526 = vsel %vm498, %v518, 0.0
    %527 = vadd.xlane.f32.xlu0 %v526
    %v528 = vpop.xlane.xlu0 %527
    %v529 = vsel %vm498, %v520, 0.0
    %530 = vadd.xlane.f32.xlu0 %v529
    %v531 = vpop.xlane.xlu0 %530
    %v532 = vsel %vm498, %v522, 0.0
    %533 = vadd.xlane.f32.xlu0 %v532
    %v534 = vpop.xlane.xlu0 %533
    %v535 = vrcp.pop %v525
    %v536 = vrcp.pop %v528
    %v537 = vrcp.pop %v531
    %v538 = vrcp.pop %v534
    %v539 = vmul.f32 %v516, %v535
    %v540 = vmul.f32 %v518, %v536
    %v541 = vmul.f32 %v520, %v537
    %v542 = vmul.f32 %v522, %v538
    %543 = vrot.lane.b32.xlu0 %v305, 96
    %v544 = vpop.permute.xlu0 %543
    %545 = vrot.lane.b32.xlu0 %v310, 96
    %v546 = vpop.permute.xlu0 %545
    %v550 = vsel %vm498, %v539, 0
    %v553 = vsel %vm498, %v540, 0
    %555 = vmatprep.subr.mxu0 0.0
    %556 = vmatpush1.msra.mxu0 %v544
    %557 = vmatprep.subr.mxu0 0.0
    %558 = vmatpush1.msra.mxu0 %v546
    %559 = vmatprep.subr.mxu0 0.0
    %560 = vmatpush1.msra.mxu0 0.0
    %561 = vmatprep.subr.mxu0 0.0
    %562 = vmatpush1.msra.mxu0 0.0
    %563 = vmatprep.subr.mxu0 0.0
    %564 = vmatpush1.msra.mxu0 0.0
    %565 = vmatprep.subr.mxu0 0.0
    %566 = vmatpush1.msra.mxu0 0.0
    %567 = vmatprep.subr.mxu0 0.0
    %568 = vmatpush1.msra.mxu0 0.0
    %569 = vmatprep.subr.mxu0 0.0
    %570 = vmatpush1.msra.mxu0 0.0
    %571 = vmatprep.subr.mxu0 0.0
    %572 = vmatpush1.msra.mxu0 0.0
    %573 = vmatprep.subr.mxu0 0.0
    %574 = vmatpush1.msra.mxu0 0.0
    %575 = vmatprep.subr.mxu0 0.0
    %576 = vmatpush1.msra.mxu0 0.0
    %577 = vmatprep.subr.mxu0 0.0
    %578 = vmatpush1.msra.mxu0 0.0
    %579 = vmatprep.subr.mxu0 0.0
    %580 = vmatpush1.msra.mxu0 0.0
    %581 = vmatprep.subr.mxu0 0.0
    %582 = vmatpush1.msra.mxu0 0.0
    %583 = vmatprep.subr.mxu0 0.0
    %584 = vmatpush1.msra.mxu0 0.0
    %585 = vmatprep.subr.mxu0 0.0
    %586 = vmatpush1.msra.mxu0 0.0
    %587 = vmatprep.subr.mxu0 0.0
    %588 = vmatpush1.msra.mxu0 0.0
    %589 = vmatprep.subr.mxu0 0.0
    %590 = vmatpush1.msra.mxu0 0.0
    %591 = vmatprep.subr.mxu0 0.0
    %592 = vmatpush1.msra.mxu0 0.0
    %593 = vmatprep.subr.mxu0 0.0
    %594 = vmatpush1.msra.mxu0 0.0
    %595 = vmatprep.subr.mxu0 0.0
    %596 = vmatpush1.msra.mxu0 0.0
    %597 = vmatprep.subr.mxu0 0.0
    %598 = vmatpush1.msra.mxu0 0.0
    %599 = vmatprep.subr.mxu0 0.0
    %600 = vmatpush1.msra.mxu0 0.0
    %601 = vmatprep.subr.mxu0 0.0
    %602 = vmatpush1.msra.mxu0 0.0
    %603 = vmatprep.subr.mxu0 0.0
    %604 = vmatpush1.msra.mxu0 0.0
    %605 = vmatprep.subr.mxu0 0.0
    %606 = vmatpush1.msra.mxu0 0.0
    %607 = vmatprep.subr.mxu0 0.0
    %608 = vmatpush1.msra.mxu0 0.0
    %609 = vmatprep.subr.mxu0 0.0
    %610 = vmatpush1.msra.mxu0 0.0
    %611 = vmatprep.subr.mxu0 0.0
    %612 = vmatpush1.msra.mxu0 0.0
    %613 = vmatprep.subr.mxu0 0.0
    %614 = vmatpush1.msra.mxu0 0.0
    %615 = vmatprep.subr.mxu0 0.0
    %616 = vmatpush1.msra.mxu0 0.0
    %617 = vmatprep.subr.mxu0 0.0
    %618 = vmatpush1.msra.mxu0 0.0
    %619 = vmatprep.mubr.f32.mxu0 0.0
    %620 = vmatmul.mubr.f32.gmra.mrb[0].mxu0 %v550
    %v621 = vpop.f32.mrb[0].mxu0
    %v622 = vadd.f32 0.0, %v621
    %v623 = vpop.f32.mrb[0].mxu0
    %624 = vmatprep.mubr.f32.mxu0 0.0
    %625 = vmatmul.mubr.f32.gmra.mrb[0].mxu0 %v553
    %v626 = vpop.f32.mrb[0].mxu0
    %v627 = vadd.f32 0.0, %v626
    %v628 = vpop.f32.mrb[0].mxu0
    %629 = vdwg.mxu0
    %630 = vrot.lane.b32.xlu0 %v315, 96
    %v631 = vpop.permute.xlu0 %630
    %632 = vrot.lane.b32.xlu0 %v320, 96
    %v633 = vpop.permute.xlu0 %632
    %v637 = vsel %vm498, %v541, 0
    %v640 = vsel %vm498, %v542, 0
    %642 = vmatprep.subr.mxu0 0.0
    %643 = vmatpush1.msra.mxu0 %v631
    %644 = vmatprep.subr.mxu0 0.0
    %645 = vmatpush1.msra.mxu0 %v633
    %646 = vmatprep.subr.mxu0 0.0
    %647 = vmatpush1.msra.mxu0 0.0
    %648 = vmatprep.subr.mxu0 0.0
    %649 = vmatpush1.msra.mxu0 0.0
    %650 = vmatprep.subr.mxu0 0.0
    %651 = vmatpush1.msra.mxu0 0.0
    %652 = vmatprep.subr.mxu0 0.0
    %653 = vmatpush1.msra.mxu0 0.0
    %654 = vmatprep.subr.mxu0 0.0
    %655 = vmatpush1.msra.mxu0 0.0
    %656 = vmatprep.subr.mxu0 0.0
    %657 = vmatpush1.msra.mxu0 0.0
    %658 = vmatprep.subr.mxu0 0.0
    %659 = vmatpush1.msra.mxu0 0.0
    %660 = vmatprep.subr.mxu0 0.0
    %661 = vmatpush1.msra.mxu0 0.0
    %662 = vmatprep.subr.mxu0 0.0
    %663 = vmatpush1.msra.mxu0 0.0
    %664 = vmatprep.subr.mxu0 0.0
    %665 = vmatpush1.msra.mxu0 0.0
    %666 = vmatprep.subr.mxu0 0.0
    %667 = vmatpush1.msra.mxu0 0.0
    %668 = vmatprep.subr.mxu0 0.0
    %669 = vmatpush1.msra.mxu0 0.0
    %670 = vmatprep.subr.mxu0 0.0
    %671 = vmatpush1.msra.mxu0 0.0
    %672 = vmatprep.subr.mxu0 0.0
    %673 = vmatpush1.msra.mxu0 0.0
    %674 = vmatprep.subr.mxu0 0.0
    %675 = vmatpush1.msra.mxu0 0.0
    %676 = vmatprep.subr.mxu0 0.0
    %677 = vmatpush1.msra.mxu0 0.0
    %678 = vmatprep.subr.mxu0 0.0
    %679 = vmatpush1.msra.mxu0 0.0
    %680 = vmatprep.subr.mxu0 0.0
    %681 = vmatpush1.msra.mxu0 0.0
    %682 = vmatprep.subr.mxu0 0.0
    %683 = vmatpush1.msra.mxu0 0.0
    %684 = vmatprep.subr.mxu0 0.0
    %685 = vmatpush1.msra.mxu0 0.0
    %686 = vmatprep.subr.mxu0 0.0
    %687 = vmatpush1.msra.mxu0 0.0
    %688 = vmatprep.subr.mxu0 0.0
    %689 = vmatpush1.msra.mxu0 0.0
    %690 = vmatprep.subr.mxu0 0.0
    %691 = vmatpush1.msra.mxu0 0.0
    %692 = vmatprep.subr.mxu0 0.0
    %693 = vmatpush1.msra.mxu0 0.0
    %694 = vmatprep.subr.mxu0 0.0
    %695 = vmatpush1.msra.mxu0 0.0
    %696 = vmatprep.subr.mxu0 0.0
    %697 = vmatpush1.msra.mxu0 0.0
    %698 = vmatprep.subr.mxu0 0.0
    %699 = vmatpush1.msra.mxu0 0.0
    %700 = vmatprep.subr.mxu0 0.0
    %701 = vmatpush1.msra.mxu0 0.0
    %702 = vmatprep.subr.mxu0 0.0
    %703 = vmatpush1.msra.mxu0 0.0
    %704 = vmatprep.subr.mxu0 0.0
    %705 = vmatpush1.msra.mxu0 0.0
    %706 = vmatprep.mubr.f32.mxu0 0.0
    %707 = vmatmul.mubr.f32.gmra.mrb[0].mxu0 %v637
    %v708 = vpop.f32.mrb[0].mxu0
    %v709 = vadd.f32 0.0, %v708
    %v710 = vpop.f32.mrb[0].mxu0
    %711 = vmatprep.mubr.f32.mxu0 0.0
    %712 = vmatmul.mubr.f32.gmra.mrb[0].mxu0 %v640
    %v713 = vpop.f32.mrb[0].mxu0
    %v714 = vadd.f32 0.0, %v713
    %v715 = vpop.f32.mrb[0].mxu0
    %716 = vdwg.mxu0
    %v717 = vld [vmem:[#allocation10] sm:$0xff]
    %718 = vrot.lane.b32.xlu0 %v197, 120
    %v719 = vpop.permute.xlu0 %718
    %720 = vrot.lane.b32.xlu0 %v202, 120
    %v721 = vpop.permute.xlu0 %720
    %722 = vrot.lane.b32.xlu0 %v305, 120
    %v723 = vpop.permute.xlu0 %722
    %724 = vrot.lane.b32.xlu0 %v310, 120
    %v725 = vpop.permute.xlu0 %724
    %v726 = vsel %vm323, %v719, 0
    %v728 = vsel %vm323, %v721, 0
    %v730 = vsel %vm323, %v723, 0
    %v732 = vsel %vm323, %v725, 0
    %734 = vmatprep.subr.mxu0 0.0
    %735 = vmatpush1.xpose.msra.mxu0 %v730
    %736 = vmatprep.subr.mxu0 0.0
    %737 = vmatpush1.xpose.msra.mxu0 %v732
    %738 = vmatprep.subr.mxu0 0.0
    %739 = vmatpush1.xpose.msra.mxu0 0.0
    %740 = vmatprep.subr.mxu0 0.0
    %741 = vmatpush1.xpose.msra.mxu0 0.0
    %742 = vmatprep.subr.mxu0 0.0
    %743 = vmatpush1.xpose.msra.mxu0 0.0
    %744 = vmatprep.subr.mxu0 0.0
    %745 = vmatpush1.xpose.msra.mxu0 0.0
    %746 = vmatprep.subr.mxu0 0.0
    %747 = vmatpush1.xpose.msra.mxu0 0.0
    %748 = vmatprep.subr.mxu0 0.0
    %749 = vmatpush1.xpose.msra.mxu0 0.0
    %750 = vmatprep.subr.mxu0 0.0
    %751 = vmatpush1.xpose.msra.mxu0 0.0
    %752 = vmatprep.subr.mxu0 0.0
    %753 = vmatpush1.xpose.msra.mxu0 0.0
    %754 = vmatprep.subr.mxu0 0.0
    %755 = vmatpush1.xpose.msra.mxu0 0.0
    %756 = vmatprep.subr.mxu0 0.0
    %757 = vmatpush1.xpose.msra.mxu0 0.0
    %758 = vmatprep.subr.mxu0 0.0
    %759 = vmatpush1.xpose.msra.mxu0 0.0
    %760 = vmatprep.subr.mxu0 0.0
    %761 = vmatpush1.xpose.msra.mxu0 0.0
    %762 = vmatprep.subr.mxu0 0.0
    %763 = vmatpush1.xpose.msra.mxu0 0.0
    %764 = vmatprep.subr.mxu0 0.0
    %765 = vmatpush1.xpose.msra.mxu0 0.0
    %766 = vmatprep.subr.mxu0 0.0
    %767 = vmatpush1.xpose.msra.mxu0 0.0
    %768 = vmatprep.subr.mxu0 0.0
    %769 = vmatpush1.xpose.msra.mxu0 0.0
    %770 = vmatprep.subr.mxu0 0.0
    %771 = vmatpush1.xpose.msra.mxu0 0.0
    %772 = vmatprep.subr.mxu0 0.0
    %773 = vmatpush1.xpose.msra.mxu0 0.0
    %774 = vmatprep.subr.mxu0 0.0
    %775 = vmatpush1.xpose.msra.mxu0 0.0
    %776 = vmatprep.subr.mxu0 0.0
    %777 = vmatpush1.xpose.msra.mxu0 0.0
    %778 = vmatprep.subr.mxu0 0.0
    %779 = vmatpush1.xpose.msra.mxu0 0.0
    %780 = vmatprep.subr.mxu0 0.0
    %781 = vmatpush1.xpose.msra.mxu0 0.0
    %782 = vmatprep.subr.mxu0 0.0
    %783 = vmatpush1.xpose.msra.mxu0 0.0
    %784 = vmatprep.subr.mxu0 0.0
    %785 = vmatpush1.xpose.msra.mxu0 0.0
    %786 = vmatprep.subr.mxu0 0.0
    %787 = vmatpush1.xpose.msra.mxu0 0.0
    %788 = vmatprep.subr.mxu0 0.0
    %789 = vmatpush1.xpose.msra.mxu0 0.0
    %790 = vmatprep.subr.mxu0 0.0
    %791 = vmatpush1.xpose.msra.mxu0 0.0
    %792 = vmatprep.subr.mxu0 0.0
    %793 = vmatpush1.xpose.msra.mxu0 0.0
    %794 = vmatprep.subr.mxu0 0.0
    %795 = vmatpush1.xpose.msra.mxu0 0.0
    %796 = vmatprep.subr.mxu0 0.0
    %797 = vmatpush1.xpose.msra.mxu0 0.0
    %798 = vmatprep.mubr.f32.mxu0 0.0
    %799 = vmatmul.mubr.f32.gmra.mrb[0].mxu0 %v726
    %v800 = vpop.f32.mrb[0].mxu0
    %v801 = vadd.f32 0.0, %v800
    %v802 = vpop.f32.mrb[0].mxu0
    %803 = vmatprep.mubr.f32.mxu0 0.0
    %804 = vmatmul.mubr.f32.gmra.mrb[0].mxu0 %v728
    %v805 = vpop.f32.mrb[0].mxu0
    %v806 = vadd.f32 0.0, %v805
    %v807 = vpop.f32.mrb[0].mxu0
    %808 = vdwg.mxu0
    %809 = vrot.lane.b32.xlu0 %v207, 120
    %v810 = vpop.permute.xlu0 %809
    %811 = vrot.lane.b32.xlu0 %v212, 120
    %v812 = vpop.permute.xlu0 %811
    %813 = vrot.lane.b32.xlu0 %v315, 120
    %v814 = vpop.permute.xlu0 %813
    %815 = vrot.lane.b32.xlu0 %v320, 120
    %v816 = vpop.permute.xlu0 %815
    %v817 = vsel %vm323, %v810, 0
    %v819 = vsel %vm323, %v812, 0
    %v821 = vsel %vm323, %v814, 0
    %v823 = vsel %vm323, %v816, 0
    %825 = vmatprep.subr.mxu0 0.0
    %826 = vmatpush1.xpose.msra.mxu0 %v821
    %827 = vmatprep.subr.mxu0 0.0
    %828 = vmatpush1.xpose.msra.mxu0 %v823
    %829 = vmatprep.subr.mxu0 0.0
    %830 = vmatpush1.xpose.msra.mxu0 0.0
    %831 = vmatprep.subr.mxu0 0.0
    %832 = vmatpush1.xpose.msra.mxu0 0.0
    %833 = vmatprep.subr.mxu0 0.0
    %834 = vmatpush1.xpose.msra.mxu0 0.0
    %835 = vmatprep.subr.mxu0 0.0
    %836 = vmatpush1.xpose.msra.mxu0 0.0
    %837 = vmatprep.subr.mxu0 0.0
    %838 = vmatpush1.xpose.msra.mxu0 0.0
    %839 = vmatprep.subr.mxu0 0.0
    %840 = vmatpush1.xpose.msra.mxu0 0.0
    %841 = vmatprep.subr.mxu0 0.0
    %842 = vmatpush1.xpose.msra.mxu0 0.0
    %843 = vmatprep.subr.mxu0 0.0
    %844 = vmatpush1.xpose.msra.mxu0 0.0
    %845 = vmatprep.subr.mxu0 0.0
    %846 = vmatpush1.xpose.msra.mxu0 0.0
    %847 = vmatprep.subr.mxu0 0.0
    %848 = vmatpush1.xpose.msra.mxu0 0.0
    %849 = vmatprep.subr.mxu0 0.0
    %850 = vmatpush1.xpose.msra.mxu0 0.0
    %851 = vmatprep.subr.mxu0 0.0
    %852 = vmatpush1.xpose.msra.mxu0 0.0
    %853 = vmatprep.subr.mxu0 0.0
    %854 = vmatpush1.xpose.msra.mxu0 0.0
    %855 = vmatprep.subr.mxu0 0.0
    %856 = vmatpush1.xpose.msra.mxu0 0.0
    %857 = vmatprep.subr.mxu0 0.0
    %858 = vmatpush1.xpose.msra.mxu0 0.0
    %859 = vmatprep.subr.mxu0 0.0
    %860 = vmatpush1.xpose.msra.mxu0 0.0
    %861 = vmatprep.subr.mxu0 0.0
    %862 = vmatpush1.xpose.msra.mxu0 0.0
    %863 = vmatprep.subr.mxu0 0.0
    %864 = vmatpush1.xpose.msra.mxu0 0.0
    %865 = vmatprep.subr.mxu0 0.0
    %866 = vmatpush1.xpose.msra.mxu0 0.0
    %867 = vmatprep.subr.mxu0 0.0
    %868 = vmatpush1.xpose.msra.mxu0 0.0
    %869 = vmatprep.subr.mxu0 0.0
    %870 = vmatpush1.xpose.msra.mxu0 0.0
    %871 = vmatprep.subr.mxu0 0.0
    %872 = vmatpush1.xpose.msra.mxu0 0.0
    %873 = vmatprep.subr.mxu0 0.0
    %874 = vmatpush1.xpose.msra.mxu0 0.0
    %875 = vmatprep.subr.mxu0 0.0
    %876 = vmatpush1.xpose.msra.mxu0 0.0
    %877 = vmatprep.subr.mxu0 0.0
    %878 = vmatpush1.xpose.msra.mxu0 0.0
    %879 = vmatprep.subr.mxu0 0.0
    %880 = vmatpush1.xpose.msra.mxu0 0.0
    %881 = vmatprep.subr.mxu0 0.0
    %882 = vmatpush1.xpose.msra.mxu0 0.0
    %883 = vmatprep.subr.mxu0 0.0
    %884 = vmatpush1.xpose.msra.mxu0 0.0
    %885 = vmatprep.subr.mxu0 0.0
    %886 = vmatpush1.xpose.msra.mxu0 0.0
    %887 = vmatprep.subr.mxu0 0.0
    %888 = vmatpush1.xpose.msra.mxu0 0.0
    %889 = vmatprep.mubr.f32.mxu0 0.0
    %890 = vmatmul.mubr.f32.gmra.mrb[0].mxu0 %v817
    %v891 = vpop.f32.mrb[0].mxu0
    %v892 = vadd.f32 0.0, %v891
    %v893 = vpop.f32.mrb[0].mxu0
    %894 = vmatprep.mubr.f32.mxu0 0.0
    %895 = vmatmul.mubr.f32.gmra.mrb[0].mxu0 %v819
    %v896 = vpop.f32.mrb[0].mxu0
    %v897 = vadd.f32 0.0, %v896
    %v898 = vpop.f32.mrb[0].mxu0
    %899 = vdwg.mxu0
    %v900 = vsel %vm498, %v801, -inf
    %901 = vmax.xlane.f32.xlu0 %v900
    %v902 = vpop.xlane.xlu0 %901
    %v903 = vsel %vm498, %v806, -inf
    %904 = vmax.xlane.f32.xlu0 %v903
    %v905 = vpop.xlane.xlu0 %904
    %v906 = vsel %vm498, %v892, -inf
    %907 = vmax.xlane.f32.xlu0 %v906
    %v908 = vpop.xlane.xlu0 %907
    %v909 = vsel %vm498, %v897, -inf
    %910 = vmax.xlane.f32.xlu0 %v909
    %v911 = vpop.xlane.xlu0 %910
    %v912 = vsub.f32 %v801, %v902
    %v913 = vsub.f32 %v806, %v905
    %v914 = vsub.f32 %v892, %v908
    %v915 = vsub.f32 %v897, %v911
    %v916 = vmul.f32 %v912, 1.442695
    %v917 = vpow.pop %v916
    %v918 = vmul.f32 %v913, 1.442695
    %v919 = vpow.pop %v918
    %v920 = vmul.f32 %v914, 1.442695
    %v921 = vpow.pop %v920
    %v922 = vmul.f32 %v915, 1.442695
    %v923 = vpow.pop %v922
    %v924 = vsel %vm498, %v917, 0.0
    %925 = vadd.xlane.f32.xlu0 %v924
    %v926 = vpop.xlane.xlu0 %925
    %v927 = vsel %vm498, %v919, 0.0
    %928 = vadd.xlane.f32.xlu0 %v927
    %v929 = vpop.xlane.xlu0 %928
    %v930 = vsel %vm498, %v921, 0.0
    %931 = vadd.xlane.f32.xlu0 %v930
    %v932 = vpop.xlane.xlu0 %931
    %v933 = vsel %vm498, %v923, 0.0
    %934 = vadd.xlane.f32.xlu0 %v933
    %v935 = vpop.xlane.xlu0 %934
    %v936 = vrcp.pop %v926
    %v937 = vrcp.pop %v929
    %v938 = vrcp.pop %v932
    %v939 = vrcp.pop %v935
    %v940 = vmul.f32 %v917, %v936
    %v941 = vmul.f32 %v919, %v937
    %v942 = vmul.f32 %v921, %v938
    %v943 = vmul.f32 %v923, %v939
    %944 = vrot.lane.b32.xlu0 %v305, 88
    %v945 = vpop.permute.xlu0 %944
    %946 = vrot.lane.b32.xlu0 %v310, 88
    %v947 = vpop.permute.xlu0 %946
    %v951 = vsel %vm498, %v940, 0
    %v954 = vsel %vm498, %v941, 0
    %956 = vmatprep.subr.mxu0 0.0
    %957 = vmatpush1.msra.mxu0 %v945
    %958 = vmatprep.subr.mxu0 0.0
    %959 = vmatpush1.msra.mxu0 %v947
    %960 = vmatprep.subr.mxu0 0.0
    %961 = vmatpush1.msra.mxu0 0.0
    %962 = vmatprep.subr.mxu0 0.0
    %963 = vmatpush1.msra.mxu0 0.0
    %964 = vmatprep.subr.mxu0 0.0
    %965 = vmatpush1.msra.mxu0 0.0
    %966 = vmatprep.subr.mxu0 0.0
    %967 = vmatpush1.msra.mxu0 0.0
    %968 = vmatprep.subr.mxu0 0.0
    %969 = vmatpush1.msra.mxu0 0.0
    %970 = vmatprep.subr.mxu0 0.0
    %971 = vmatpush1.msra.mxu0 0.0
    %972 = vmatprep.subr.mxu0 0.0
    %973 = vmatpush1.msra.mxu0 0.0
    %974 = vmatprep.subr.mxu0 0.0
    %975 = vmatpush1.msra.mxu0 0.0
    %976 = vmatprep.subr.mxu0 0.0
    %977 = vmatpush1.msra.mxu0 0.0
    %978 = vmatprep.subr.mxu0 0.0
    %979 = vmatpush1.msra.mxu0 0.0
    %980 = vmatprep.subr.mxu0 0.0
    %981 = vmatpush1.msra.mxu0 0.0
    %982 = vmatprep.subr.mxu0 0.0
    %983 = vmatpush1.msra.mxu0 0.0
    %984 = vmatprep.subr.mxu0 0.0
    %985 = vmatpush1.msra.mxu0 0.0
    %986 = vmatprep.subr.mxu0 0.0
    %987 = vmatpush1.msra.mxu0 0.0
    %988 = vmatprep.subr.mxu0 0.0
    %989 = vmatpush1.msra.mxu0 0.0
    %990 = vmatprep.subr.mxu0 0.0
    %991 = vmatpush1.msra.mxu0 0.0
    %992 = vmatprep.subr.mxu0 0.0
    %993 = vmatpush1.msra.mxu0 0.0
    %994 = vmatprep.subr.mxu0 0.0
    %995 = vmatpush1.msra.mxu0 0.0
    %996 = vmatprep.subr.mxu0 0.0
    %997 = vmatpush1.msra.mxu0 0.0
    %998 = vmatprep.subr.mxu0 0.0
    %999 = vmatpush1.msra.mxu0 0.0
    %1000 = vmatprep.subr.mxu0 0.0
    %1001 = vmatpush1.msra.mxu0 0.0
    %1002 = vmatprep.subr.mxu0 0.0
    %1003 = vmatpush1.msra.mxu0 0.0
    %1004 = vmatprep.subr.mxu0 0.0
    %1005 = vmatpush1.msra.mxu0 0.0
    %1006 = vmatprep.subr.mxu0 0.0
    %1007 = vmatpush1.msra.mxu0 0.0
    %1008 = vmatprep.subr.mxu0 0.0
    %1009 = vmatpush1.msra.mxu0 0.0
    %1010 = vmatprep.subr.mxu0 0.0
    %1011 = vmatpush1.msra.mxu0 0.0
    %1012 = vmatprep.subr.mxu0 0.0
    %1013 = vmatpush1.msra.mxu0 0.0
    %1014 = vmatprep.subr.mxu0 0.0
    %1015 = vmatpush1.msra.mxu0 0.0
    %1016 = vmatprep.subr.mxu0 0.0
    %1017 = vmatpush1.msra.mxu0 0.0
    %1018 = vmatprep.subr.mxu0 0.0
    %1019 = vmatpush1.msra.mxu0 0.0
    %1020 = vmatprep.mubr.f32.mxu0 0.0
    %1021 = vmatmul.mubr.f32.gmra.mrb[0].mxu0 %v951
    %v1022 = vpop.f32.mrb[0].mxu0
    %v1023 = vadd.f32 0.0, %v1022
    %v1024 = vpop.f32.mrb[0].mxu0
    %1025 = vmatprep.mubr.f32.mxu0 0.0
    %1026 = vmatmul.mubr.f32.gmra.mrb[0].mxu0 %v954
    %v1027 = vpop.f32.mrb[0].mxu0
    %v1028 = vadd.f32 0.0, %v1027
    %v1029 = vpop.f32.mrb[0].mxu0
    %1030 = vdwg.mxu0
    %1031 = vrot.lane.b32.xlu0 %v315, 88
    %v1032 = vpop.permute.xlu0 %1031
    %1033 = vrot.lane.b32.xlu0 %v320, 88
    %v1034 = vpop.permute.xlu0 %1033
    %v1038 = vsel %vm498, %v942, 0
    %v1041 = vsel %vm498, %v943, 0
    %1043 = vmatprep.subr.mxu0 0.0
    %1044 = vmatpush1.msra.mxu0 %v1032
    %1045 = vmatprep.subr.mxu0 0.0
    %1046 = vmatpush1.msra.mxu0 %v1034
    %1047 = vmatprep.subr.mxu0 0.0
    %1048 = vmatpush1.msra.mxu0 0.0
    %1049 = vmatprep.subr.mxu0 0.0
    %1050 = vmatpush1.msra.mxu0 0.0
    %1051 = vmatprep.subr.mxu0 0.0
    %1052 = vmatpush1.msra.mxu0 0.0
    %1053 = vmatprep.subr.mxu0 0.0
    %1054 = vmatpush1.msra.mxu0 0.0
    %1055 = vmatprep.subr.mxu0 0.0
    %1056 = vmatpush1.msra.mxu0 0.0
    %1057 = vmatprep.subr.mxu0 0.0
    %1058 = vmatpush1.msra.mxu0 0.0
    %1059 = vmatprep.subr.mxu0 0.0
    %1060 = vmatpush1.msra.mxu0 0.0
    %1061 = vmatprep.subr.mxu0 0.0
    %1062 = vmatpush1.msra.mxu0 0.0
    %1063 = vmatprep.subr.mxu0 0.0
    %1064 = vmatpush1.msra.mxu0 0.0
    %1065 = vmatprep.subr.mxu0 0.0
    %1066 = vmatpush1.msra.mxu0 0.0
    %1067 = vmatprep.subr.mxu0 0.0
    %1068 = vmatpush1.msra.mxu0 0.0
    %1069 = vmatprep.subr.mxu0 0.0
    %1070 = vmatpush1.msra.mxu0 0.0
    %1071 = vmatprep.subr.mxu0 0.0
    %1072 = vmatpush1.msra.mxu0 0.0
    %1073 = vmatprep.subr.mxu0 0.0
    %1074 = vmatpush1.msra.mxu0 0.0
    %1075 = vmatprep.subr.mxu0 0.0
    %1076 = vmatpush1.msra.mxu0 0.0
    %1077 = vmatprep.subr.mxu0 0.0
    %1078 = vmatpush1.msra.mxu0 0.0
    %1079 = vmatprep.subr.mxu0 0.0
    %1080 = vmatpush1.msra.mxu0 0.0
    %1081 = vmatprep.subr.mxu0 0.0
    %1082 = vmatpush1.msra.mxu0 0.0
    %1083 = vmatprep.subr.mxu0 0.0
    %1084 = vmatpush1.msra.mxu0 0.0
    %1085 = vmatprep.subr.mxu0 0.0
    %1086 = vmatpush1.msra.mxu0 0.0
    %1087 = vmatprep.subr.mxu0 0.0
    %1088 = vmatpush1.msra.mxu0 0.0
    %1089 = vmatprep.subr.mxu0 0.0
    %1090 = vmatpush1.msra.mxu0 0.0
    %1091 = vmatprep.subr.mxu0 0.0
    %1092 = vmatpush1.msra.mxu0 0.0
    %1093 = vmatprep.subr.mxu0 0.0
    %1094 = vmatpush1.msra.mxu0 0.0
    %1095 = vmatprep.subr.mxu0 0.0
    %1096 = vmatpush1.msra.mxu0 0.0
    %1097 = vmatprep.subr.mxu0 0.0
    %1098 = vmatpush1.msra.mxu0 0.0
    %1099 = vmatprep.subr.mxu0 0.0
    %1100 = vmatpush1.msra.mxu0 0.0
    %1101 = vmatprep.subr.mxu0 0.0
    %1102 = vmatpush1.msra.mxu0 0.0
    %1103 = vmatprep.subr.mxu0 0.0
    %1104 = vmatpush1.msra.mxu0 0.0
    %1105 = vmatprep.subr.mxu0 0.0
    %1106 = vmatpush1.msra.mxu0 0.0
    %1107 = vmatprep.mubr.f32.mxu0 0.0
    %1108 = vmatmul.mubr.f32.gmra.mrb[0].mxu0 %v1038
    %v1109 = vpop.f32.mrb[0].mxu0
    %v1110 = vadd.f32 0.0, %v1109
    %v1111 = vpop.f32.mrb[0].mxu0
    %1112 = vmatprep.mubr.f32.mxu0 0.0
    %1113 = vmatmul.mubr.f32.gmra.mrb[0].mxu0 %v1041
    %v1114 = vpop.f32.mrb[0].mxu0
    %v1115 = vadd.f32 0.0, %v1114
    %v1116 = vpop.f32.mrb[0].mxu0
    %1117 = vdwg.mxu0
    %s1118 = scalar_lea.vmem [#allocation10], 8
    %v1119 = vld [vmem:[%s1118] sm:$0xff]
    %v1121 = vsel %vm323, %v1023, 0
    %v1124 = vsel %vm323, %v1028, 0
    %v1127 = vsel %vm323, %v1110, 0
    %v1130 = vsel %vm323, %v1115, 0
    %1132 = vmatprep.subr.mxu0 0.0
    %1133 = vmatpush1.msra.mxu0 %v1119
    %1134 = vmatprep.subr.mxu0 0.0
    %1135 = vmatpush1.msra.mxu0 0.0
    %1136 = vmatprep.subr.mxu0 0.0
    %1137 = vmatpush1.msra.mxu0 0.0
    %1138 = vmatprep.subr.mxu0 0.0
    %1139 = vmatpush1.msra.mxu0 0.0
    %1140 = vmatprep.subr.mxu0 0.0
    %1141 = vmatpush1.msra.mxu0 0.0
    %1142 = vmatprep.subr.mxu0 0.0
    %1143 = vmatpush1.msra.mxu0 0.0
    %1144 = vmatprep.subr.mxu0 0.0
    %1145 = vmatpush1.msra.mxu0 0.0
    %1146 = vmatprep.subr.mxu0 0.0
    %1147 = vmatpush1.msra.mxu0 0.0
    %1148 = vmatprep.subr.mxu0 0.0
    %1149 = vmatpush1.msra.mxu0 0.0
    %1150 = vmatprep.subr.mxu0 0.0
    %1151 = vmatpush1.msra.mxu0 0.0
    %1152 = vmatprep.subr.mxu0 0.0
    %1153 = vmatpush1.msra.mxu0 0.0
    %1154 = vmatprep.subr.mxu0 0.0
    %1155 = vmatpush1.msra.mxu0 0.0
    %1156 = vmatprep.subr.mxu0 0.0
    %1157 = vmatpush1.msra.mxu0 0.0
    %1158 = vmatprep.subr.mxu0 0.0
    %1159 = vmatpush1.msra.mxu0 0.0
    %1160 = vmatprep.subr.mxu0 0.0
    %1161 = vmatpush1.msra.mxu0 0.0
    %1162 = vmatprep.subr.mxu0 0.0
    %1163 = vmatpush1.msra.mxu0 0.0
    %1164 = vmatprep.subr.mxu0 0.0
    %1165 = vmatpush1.msra.mxu0 0.0
    %1166 = vmatprep.subr.mxu0 0.0
    %1167 = vmatpush1.msra.mxu0 0.0
    %1168 = vmatprep.subr.mxu0 0.0
    %1169 = vmatpush1.msra.mxu0 0.0
    %1170 = vmatprep.subr.mxu0 0.0
    %1171 = vmatpush1.msra.mxu0 0.0
    %1172 = vmatprep.subr.mxu0 0.0
    %1173 = vmatpush1.msra.mxu0 0.0
    %1174 = vmatprep.subr.mxu0 0.0
    %1175 = vmatpush1.msra.mxu0 0.0
    %1176 = vmatprep.subr.mxu0 0.0
    %1177 = vmatpush1.msra.mxu0 0.0
    %1178 = vmatprep.subr.mxu0 0.0
    %1179 = vmatpush1.msra.mxu0 0.0
    %1180 = vmatprep.subr.mxu0 0.0
    %1181 = vmatpush1.msra.mxu0 0.0
    %1182 = vmatprep.subr.mxu0 0.0
    %1183 = vmatpush1.msra.mxu0 0.0
    %1184 = vmatprep.subr.mxu0 0.0
    %1185 = vmatpush1.msra.mxu0 0.0
    %1186 = vmatprep.subr.mxu0 0.0
    %1187 = vmatpush1.msra.mxu0 0.0
    %1188 = vmatprep.subr.mxu0 0.0
    %1189 = vmatpush1.msra.mxu0 0.0
    %1190 = vmatprep.subr.mxu0 0.0
    %1191 = vmatpush1.msra.mxu0 0.0
    %1192 = vmatprep.subr.mxu0 0.0
    %1193 = vmatpush1.msra.mxu0 0.0
    %1194 = vmatprep.subr.mxu0 0.0
    %1195 = vmatpush1.msra.mxu0 0.0
    %1196 = vmatprep.mubr.f32.mxu0 0.0
    %1197 = vmatmul.mubr.f32.gmra.mrb[0].mxu0 %v1121
    %v1198 = vpop.f32.mrb[0].mxu0
    %v1199 = vadd.f32 0.0, %v1198
    %v1200 = vpop.f32.mrb[0].mxu0
    %1201 = vmatprep.mubr.f32.mxu0 0.0
    %1202 = vmatmul.mubr.f32.gmra.mrb[0].mxu0 %v1124
    %v1203 = vpop.f32.mrb[0].mxu0
    %v1204 = vadd.f32 0.0, %v1203
    %v1205 = vpop.f32.mrb[0].mxu0
    %1206 = vmatprep.mubr.f32.mxu0 0.0
    %1207 = vmatmul.mubr.f32.gmra.mrb[0].mxu0 %v1127
    %v1208 = vpop.f32.mrb[0].mxu0
    %v1209 = vadd.f32 0.0, %v1208
    %v1210 = vpop.f32.mrb[0].mxu0
    %1211 = vmatprep.mubr.f32.mxu0 0.0
    %1212 = vmatmul.mubr.f32.gmra.mrb[0].mxu0 %v1130
    %v1213 = vpop.f32.mrb[0].mxu0
    %v1214 = vadd.f32 0.0, %v1213
    %v1215 = vpop.f32.mrb[0].mxu0
    %1216 = vdwg.mxu0
    %v1218 = vsel %vm323, %v622, 0
    %v1221 = vsel %vm323, %v627, 0
    %v1224 = vsel %vm323, %v709, 0
    %v1227 = vsel %vm323, %v714, 0
    %1229 = vmatprep.subr.mxu0 0.0
    %1230 = vmatpush1.msra.mxu0 %v717
    %1231 = vmatprep.subr.mxu0 0.0
    %1232 = vmatpush1.msra.mxu0 0.0
    %1233 = vmatprep.subr.mxu0 0.0
    %1234 = vmatpush1.msra.mxu0 0.0
    %1235 = vmatprep.subr.mxu0 0.0
    %1236 = vmatpush1.msra.mxu0 0.0
    %1237 = vmatprep.subr.mxu0 0.0
    %1238 = vmatpush1.msra.mxu0 0.0
    %1239 = vmatprep.subr.mxu0 0.0
    %1240 = vmatpush1.msra.mxu0 0.0
    %1241 = vmatprep.subr.mxu0 0.0
    %1242 = vmatpush1.msra.mxu0 0.0
    %1243 = vmatprep.subr.mxu0 0.0
    %1244 = vmatpush1.msra.mxu0 0.0
    %1245 = vmatprep.subr.mxu0 0.0
    %1246 = vmatpush1.msra.mxu0 0.0
    %1247 = vmatprep.subr.mxu0 0.0
    %1248 = vmatpush1.msra.mxu0 0.0
    %1249 = vmatprep.subr.mxu0 0.0
    %1250 = vmatpush1.msra.mxu0 0.0
    %1251 = vmatprep.subr.mxu0 0.0
    %1252 = vmatpush1.msra.mxu0 0.0
    %1253 = vmatprep.subr.mxu0 0.0
    %1254 = vmatpush1.msra.mxu0 0.0
    %1255 = vmatprep.subr.mxu0 0.0
    %1256 = vmatpush1.msra.mxu0 0.0
    %1257 = vmatprep.subr.mxu0 0.0
    %1258 = vmatpush1.msra.mxu0 0.0
    %1259 = vmatprep.subr.mxu0 0.0
    %1260 = vmatpush1.msra.mxu0 0.0
    %1261 = vmatprep.subr.mxu0 0.0
    %1262 = vmatpush1.msra.mxu0 0.0
    %1263 = vmatprep.subr.mxu0 0.0
    %1264 = vmatpush1.msra.mxu0 0.0
    %1265 = vmatprep.subr.mxu0 0.0
    %1266 = vmatpush1.msra.mxu0 0.0
    %1267 = vmatprep.subr.mxu0 0.0
    %1268 = vmatpush1.msra.mxu0 0.0
    %1269 = vmatprep.subr.mxu0 0.0
    %1270 = vmatpush1.msra.mxu0 0.0
    %1271 = vmatprep.subr.mxu0 0.0
    %1272 = vmatpush1.msra.mxu0 0.0
    %1273 = vmatprep.subr.mxu0 0.0
    %1274 = vmatpush1.msra.mxu0 0.0
    %1275 = vmatprep.subr.mxu0 0.0
    %1276 = vmatpush1.msra.mxu0 0.0
    %1277 = vmatprep.subr.mxu0 0.0
    %1278 = vmatpush1.msra.mxu0 0.0
    %1279 = vmatprep.subr.mxu0 0.0
    %1280 = vmatpush1.msra.mxu0 0.0
    %1281 = vmatprep.subr.mxu0 0.0
    %1282 = vmatpush1.msra.mxu0 0.0
    %1283 = vmatprep.subr.mxu0 0.0
    %1284 = vmatpush1.msra.mxu0 0.0
    %1285 = vmatprep.subr.mxu0 0.0
    %1286 = vmatpush1.msra.mxu0 0.0
    %1287 = vmatprep.subr.mxu0 0.0
    %1288 = vmatpush1.msra.mxu0 0.0
    %1289 = vmatprep.subr.mxu0 0.0
    %1290 = vmatpush1.msra.mxu0 0.0
    %1291 = vmatprep.subr.mxu0 0.0
    %1292 = vmatpush1.msra.mxu0 0.0
    %1293 = vmatprep.mubr.f32.mxu0 0.0
    %1294 = vmatmul.mubr.f32.gmra.mrb[0].mxu0 %v1218
    %v1295 = vpop.f32.mrb[0].mxu0
    %v1296 = vadd.f32 %v1199, %v1295
    %v1297 = vpop.f32.mrb[0].mxu0
    %1298 = vmatprep.mubr.f32.mxu0 0.0
    %1299 = vmatmul.mubr.f32.gmra.mrb[0].mxu0 %v1221
    %v1300 = vpop.f32.mrb[0].mxu0
    %v1301 = vadd.f32 %v1204, %v1300
    %v1302 = vpop.f32.mrb[0].mxu0
    %1303 = vmatprep.mubr.f32.mxu0 0.0
    %1304 = vmatmul.mubr.f32.gmra.mrb[0].mxu0 %v1224
    %v1305 = vpop.f32.mrb[0].mxu0
    %v1306 = vadd.f32 %v1209, %v1305
    %v1307 = vpop.f32.mrb[0].mxu0
    %1308 = vmatprep.mubr.f32.mxu0 0.0
    %1309 = vmatmul.mubr.f32.gmra.mrb[0].mxu0 %v1227
    %v1310 = vpop.f32.mrb[0].mxu0
    %v1311 = vadd.f32 %v1214, %v1310
    %v1312 = vpop.f32.mrb[0].mxu0
    %1313 = vdwg.mxu0
    %1314 = vrot.lane.b32.xlu0 %v197, 112
    %v1315 = vpop.permute.xlu0 %1314
    %1316 = vrot.lane.b32.xlu0 %v202, 112
    %v1317 = vpop.permute.xlu0 %1316
    %1318 = vrot.lane.b32.xlu0 %v305, 112
    %v1319 = vpop.permute.xlu0 %1318
    %1320 = vrot.lane.b32.xlu0 %v310, 112
    %v1321 = vpop.permute.xlu0 %1320
    %v1322 = vsel %vm323, %v1315, 0
    %v1324 = vsel %vm323, %v1317, 0
    %v1326 = vsel %vm323, %v1319, 0
    %v1328 = vsel %vm323, %v1321, 0
    %1330 = vmatprep.subr.mxu0 0.0
    %1331 = vmatpush1.xpose.msra.mxu0 %v1326
    %1332 = vmatprep.subr.mxu0 0.0
    %1333 = vmatpush1.xpose.msra.mxu0 %v1328
    %1334 = vmatprep.subr.mxu0 0.0
    %1335 = vmatpush1.xpose.msra.mxu0 0.0
    %1336 = vmatprep.subr.mxu0 0.0
    %1337 = vmatpush1.xpose.msra.mxu0 0.0
    %1338 = vmatprep.subr.mxu0 0.0
    %1339 = vmatpush1.xpose.msra.mxu0 0.0
    %1340 = vmatprep.subr.mxu0 0.0
    %1341 = vmatpush1.xpose.msra.mxu0 0.0
    %1342 = vmatprep.subr.mxu0 0.0
    %1343 = vmatpush1.xpose.msra.mxu0 0.0
    %1344 = vmatprep.subr.mxu0 0.0
    %1345 = vmatpush1.xpose.msra.mxu0 0.0
    %1346 = vmatprep.subr.mxu0 0.0
    %1347 = vmatpush1.xpose.msra.mxu0 0.0
    %1348 = vmatprep.subr.mxu0 0.0
    %1349 = vmatpush1.xpose.msra.mxu0 0.0
    %1350 = vmatprep.subr.mxu0 0.0
    %1351 = vmatpush1.xpose.msra.mxu0 0.0
    %1352 = vmatprep.subr.mxu0 0.0
    %1353 = vmatpush1.xpose.msra.mxu0 0.0
    %1354 = vmatprep.subr.mxu0 0.0
    %1355 = vmatpush1.xpose.msra.mxu0 0.0
    %1356 = vmatprep.subr.mxu0 0.0
    %1357 = vmatpush1.xpose.msra.mxu0 0.0
    %1358 = vmatprep.subr.mxu0 0.0
    %1359 = vmatpush1.xpose.msra.mxu0 0.0
    %1360 = vmatprep.subr.mxu0 0.0
    %1361 = vmatpush1.xpose.msra.mxu0 0.0
    %1362 = vmatprep.subr.mxu0 0.0
    %1363 = vmatpush1.xpose.msra.mxu0 0.0
    %1364 = vmatprep.subr.mxu0 0.0
    %1365 = vmatpush1.xpose.msra.mxu0 0.0
    %1366 = vmatprep.subr.mxu0 0.0
    %1367 = vmatpush1.xpose.msra.mxu0 0.0
    %1368 = vmatprep.subr.mxu0 0.0
    %1369 = vmatpush1.xpose.msra.mxu0 0.0
    %1370 = vmatprep.subr.mxu0 0.0
    %1371 = vmatpush1.xpose.msra.mxu0 0.0
    %1372 = vmatprep.subr.mxu0 0.0
    %1373 = vmatpush1.xpose.msra.mxu0 0.0
    %1374 = vmatprep.subr.mxu0 0.0
    %1375 = vmatpush1.xpose.msra.mxu0 0.0
    %1376 = vmatprep.subr.mxu0 0.0
    %1377 = vmatpush1.xpose.msra.mxu0 0.0
    %1378 = vmatprep.subr.mxu0 0.0
    %1379 = vmatpush1.xpose.msra.mxu0 0.0
    %1380 = vmatprep.subr.mxu0 0.0
    %1381 = vmatpush1.xpose.msra.mxu0 0.0
    %1382 = vmatprep.subr.mxu0 0.0
    %1383 = vmatpush1.xpose.msra.mxu0 0.0
    %1384 = vmatprep.subr.mxu0 0.0
    %1385 = vmatpush1.xpose.msra.mxu0 0.0
    %1386 = vmatprep.subr.mxu0 0.0
    %1387 = vmatpush1.xpose.msra.mxu0 0.0
    %1388 = vmatprep.subr.mxu0 0.0
    %1389 = vmatpush1.xpose.msra.mxu0 0.0
    %1390 = vmatprep.subr.mxu0 0.0
    %1391 = vmatpush1.xpose.msra.mxu0 0.0
    %1392 = vmatprep.subr.mxu0 0.0
    %1393 = vmatpush1.xpose.msra.mxu0 0.0
    %1394 = vmatprep.mubr.f32.mxu0 0.0
    %1395 = vmatmul.mubr.f32.gmra.mrb[0].mxu0 %v1322
    %v1396 = vpop.f32.mrb[0].mxu0
    %v1397 = vadd.f32 0.0, %v1396
    %v1398 = vpop.f32.mrb[0].mxu0
    %1399 = vmatprep.mubr.f32.mxu0 0.0
    %1400 = vmatmul.mubr.f32.gmra.mrb[0].mxu0 %v1324
    %v1401 = vpop.f32.mrb[0].mxu0
    %v1402 = vadd.f32 0.0, %v1401
    %v1403 = vpop.f32.mrb[0].mxu0
    %1404 = vdwg.mxu0
    %1405 = vrot.lane.b32.xlu0 %v207, 112
    %v1406 = vpop.permute.xlu0 %1405
    %1407 = vrot.lane.b32.xlu0 %v212, 112
    %v1408 = vpop.permute.xlu0 %1407
    %1409 = vrot.lane.b32.xlu0 %v315, 112
    %v1410 = vpop.permute.xlu0 %1409
    %1411 = vrot.lane.b32.xlu0 %v320, 112
    %v1412 = vpop.permute.xlu0 %1411
    %v1413 = vsel %vm323, %v1406, 0
    %v1415 = vsel %vm323, %v1408, 0
    %v1417 = vsel %vm323, %v1410, 0
    %v1419 = vsel %vm323, %v1412, 0
    %1421 = vmatprep.subr.mxu0 0.0
    %1422 = vmatpush1.xpose.msra.mxu0 %v1417
    %1423 = vmatprep.subr.mxu0 0.0
    %1424 = vmatpush1.xpose.msra.mxu0 %v1419
    %1425 = vmatprep.subr.mxu0 0.0
    %1426 = vmatpush1.xpose.msra.mxu0 0.0
    %1427 = vmatprep.subr.mxu0 0.0
    %1428 = vmatpush1.xpose.msra.mxu0 0.0
    %1429 = vmatprep.subr.mxu0 0.0
    %1430 = vmatpush1.xpose.msra.mxu0 0.0
    %1431 = vmatprep.subr.mxu0 0.0
    %1432 = vmatpush1.xpose.msra.mxu0 0.0
    %1433 = vmatprep.subr.mxu0 0.0
    %1434 = vmatpush1.xpose.msra.mxu0 0.0
    %1435 = vmatprep.subr.mxu0 0.0
    %1436 = vmatpush1.xpose.msra.mxu0 0.0
    %1437 = vmatprep.subr.mxu0 0.0
    %1438 = vmatpush1.xpose.msra.mxu0 0.0
    %1439 = vmatprep.subr.mxu0 0.0
    %1440 = vmatpush1.xpose.msra.mxu0 0.0
    %1441 = vmatprep.subr.mxu0 0.0
    %1442 = vmatpush1.xpose.msra.mxu0 0.0
    %1443 = vmatprep.subr.mxu0 0.0
    %1444 = vmatpush1.xpose.msra.mxu0 0.0
    %1445 = vmatprep.subr.mxu0 0.0
    %1446 = vmatpush1.xpose.msra.mxu0 0.0
    %1447 = vmatprep.subr.mxu0 0.0
    %1448 = vmatpush1.xpose.msra.mxu0 0.0
    %1449 = vmatprep.subr.mxu0 0.0
    %1450 = vmatpush1.xpose.msra.mxu0 0.0
    %1451 = vmatprep.subr.mxu0 0.0
    %1452 = vmatpush1.xpose.msra.mxu0 0.0
    %1453 = vmatprep.subr.mxu0 0.0
    %1454 = vmatpush1.xpose.msra.mxu0 0.0
    %1455 = vmatprep.subr.mxu0 0.0
    %1456 = vmatpush1.xpose.msra.mxu0 0.0
    %1457 = vmatprep.subr.mxu0 0.0
    %1458 = vmatpush1.xpose.msra.mxu0 0.0
    %1459 = vmatprep.subr.mxu0 0.0
    %1460 = vmatpush1.xpose.msra.mxu0 0.0
    %1461 = vmatprep.subr.mxu0 0.0
    %1462 = vmatpush1.xpose.msra.mxu0 0.0
    %1463 = vmatprep.subr.mxu0 0.0
    %1464 = vmatpush1.xpose.msra.mxu0 0.0
    %1465 = vmatprep.subr.mxu0 0.0
    %1466 = vmatpush1.xpose.msra.mxu0 0.0
    %1467 = vmatprep.subr.mxu0 0.0
    %1468 = vmatpush1.xpose.msra.mxu0 0.0
    %1469 = vmatprep.subr.mxu0 0.0
    %1470 = vmatpush1.xpose.msra.mxu0 0.0
    %1471 = vmatprep.subr.mxu0 0.0
    %1472 = vmatpush1.xpose.msra.mxu0 0.0
    %1473 = vmatprep.subr.mxu0 0.0
    %1474 = vmatpush1.xpose.msra.mxu0 0.0
    %1475 = vmatprep.subr.mxu0 0.0
    %1476 = vmatpush1.xpose.msra.mxu0 0.0
    %1477 = vmatprep.subr.mxu0 0.0
    %1478 = vmatpush1.xpose.msra.mxu0 0.0
    %1479 = vmatprep.subr.mxu0 0.0
    %1480 = vmatpush1.xpose.msra.mxu0 0.0
    %1481 = vmatprep.subr.mxu0 0.0
    %1482 = vmatpush1.xpose.msra.mxu0 0.0
    %1483 = vmatprep.subr.mxu0 0.0
    %1484 = vmatpush1.xpose.msra.mxu0 0.0
    %1485 = vmatprep.mubr.f32.mxu0 0.0
    %1486 = vmatmul.mubr.f32.gmra.mrb[0].mxu0 %v1413
    %v1487 = vpop.f32.mrb[0].mxu0
    %v1488 = vadd.f32 0.0, %v1487
    %v1489 = vpop.f32.mrb[0].mxu0
    %1490 = vmatprep.mubr.f32.mxu0 0.0
    %1491 = vmatmul.mubr.f32.gmra.mrb[0].mxu0 %v1415
    %v1492 = vpop.f32.mrb[0].mxu0
    %v1493 = vadd.f32 0.0, %v1492
    %v1494 = vpop.f32.mrb[0].mxu0
    %1495 = vdwg.mxu0
    %v1496 = vsel %vm498, %v1397, -inf
    %1497 = vmax.xlane.f32.xlu0 %v1496
    %v1498 = vpop.xlane.xlu0 %1497
    %v1499 = vsel %vm498, %v1402, -inf
    %1500 = vmax.xlane.f32.xlu0 %v1499
    %v1501 = vpop.xlane.xlu0 %1500
    %v1502 = vsel %vm498, %v1488, -inf
    %1503 = vmax.xlane.f32.xlu0 %v1502
    %v1504 = vpop.xlane.xlu0 %1503
    %v1505 = vsel %vm498, %v1493, -inf
    %1506 = vmax.xlane.f32.xlu0 %v1505
    %v1507 = vpop.xlane.xlu0 %1506
    %v1508 = vsub.f32 %v1397, %v1498
    %v1509 = vsub.f32 %v1402, %v1501
    %v1510 = vsub.f32 %v1488, %v1504
    %v1511 = vsub.f32 %v1493, %v1507
    %v1512 = vmul.f32 %v1508, 1.442695
    %v1513 = vpow.pop %v1512
    %v1514 = vmul.f32 %v1509, 1.442695
    %v1515 = vpow.pop %v1514
    %v1516 = vmul.f32 %v1510, 1.442695
    %v1517 = vpow.pop %v1516
    %v1518 = vmul.f32 %v1511, 1.442695
    %v1519 = vpow.pop %v1518
    %v1520 = vsel %vm498, %v1513, 0.0
    %1521 = vadd.xlane.f32.xlu0 %v1520
    %v1522 = vpop.xlane.xlu0 %1521
    %v1523 = vsel %vm498, %v1515, 0.0
    %1524 = vadd.xlane.f32.xlu0 %v1523
    %v1525 = vpop.xlane.xlu0 %1524
    %v1526 = vsel %vm498, %v1517, 0.0
    %1527 = vadd.xlane.f32.xlu0 %v1526
    %v1528 = vpop.xlane.xlu0 %1527
    %v1529 = vsel %vm498, %v1519, 0.0
    %1530 = vadd.xlane.f32.xlu0 %v1529
    %v1531 = vpop.xlane.xlu0 %1530
    %v1532 = vrcp.pop %v1522
    %v1533 = vrcp.pop %v1525
    %v1534 = vrcp.pop %v1528
    %v1535 = vrcp.pop %v1531
    %v1536 = vmul.f32 %v1513, %v1532
    %v1537 = vmul.f32 %v1515, %v1533
    %v1538 = vmul.f32 %v1517, %v1534
    %v1539 = vmul.f32 %v1519, %v1535
    %1540 = vrot.lane.b32.xlu0 %v305, 80
    %v1541 = vpop.permute.xlu0 %1540
    %1542 = vrot.lane.b32.xlu0 %v310, 80
    %v1543 = vpop.permute.xlu0 %1542
    %v1547 = vsel %vm498, %v1536, 0
    %v1550 = vsel %vm498, %v1537, 0
    %1552 = vmatprep.subr.mxu0 0.0
    %1553 = vmatpush1.msra.mxu0 %v1541
    %1554 = vmatprep.subr.mxu0 0.0
    %1555 = vmatpush1.msra.mxu0 %v1543
    %1556 = vmatprep.subr.mxu0 0.0
    %1557 = vmatpush1.msra.mxu0 0.0
    %1558 = vmatprep.subr.mxu0 0.0
    %1559 = vmatpush1.msra.mxu0 0.0
    %1560 = vmatprep.subr.mxu0 0.0
    %1561 = vmatpush1.msra.mxu0 0.0
    %1562 = vmatprep.subr.mxu0 0.0
    %1563 = vmatpush1.msra.mxu0 0.0
    %1564 = vmatprep.subr.mxu0 0.0
    %1565 = vmatpush1.msra.mxu0 0.0
    %1566 = vmatprep.subr.mxu0 0.0
    %1567 = vmatpush1.msra.mxu0 0.0
    %1568 = vmatprep.subr.mxu0 0.0
    %1569 = vmatpush1.msra.mxu0 0.0
    %1570 = vmatprep.subr.mxu0 0.0
    %1571 = vmatpush1.msra.mxu0 0.0
    %1572 = vmatprep.subr.mxu0 0.0
    %1573 = vmatpush1.msra.mxu0 0.0
    %1574 = vmatprep.subr.mxu0 0.0
    %1575 = vmatpush1.msra.mxu0 0.0
    %1576 = vmatprep.subr.mxu0 0.0
    %1577 = vmatpush1.msra.mxu0 0.0
    %1578 = vmatprep.subr.mxu0 0.0
    %1579 = vmatpush1.msra.mxu0 0.0
    %1580 = vmatprep.subr.mxu0 0.0
    %1581 = vmatpush1.msra.mxu0 0.0
    %1582 = vmatprep.subr.mxu0 0.0
    %1583 = vmatpush1.msra.mxu0 0.0
    %1584 = vmatprep.subr.mxu0 0.0
    %1585 = vmatpush1.msra.mxu0 0.0
    %1586 = vmatprep.subr.mxu0 0.0
    %1587 = vmatpush1.msra.mxu0 0.0
    %1588 = vmatprep.subr.mxu0 0.0
    %1589 = vmatpush1.msra.mxu0 0.0
    %1590 = vmatprep.subr.mxu0 0.0
    %1591 = vmatpush1.msra.mxu0 0.0
    %1592 = vmatprep.subr.mxu0 0.0
    %1593 = vmatpush1.msra.mxu0 0.0
    %1594 = vmatprep.subr.mxu0 0.0
    %1595 = vmatpush1.msra.mxu0 0.0
    %1596 = vmatprep.subr.mxu0 0.0
    %1597 = vmatpush1.msra.mxu0 0.0
    %1598 = vmatprep.subr.mxu0 0.0
    %1599 = vmatpush1.msra.mxu0 0.0
    %1600 = vmatprep.subr.mxu0 0.0
    %1601 = vmatpush1.msra.mxu0 0.0
    %1602 = vmatprep.subr.mxu0 0.0
    %1603 = vmatpush1.msra.mxu0 0.0
    %1604 = vmatprep.subr.mxu0 0.0
    %1605 = vmatpush1.msra.mxu0 0.0
    %1606 = vmatprep.subr.mxu0 0.0
    %1607 = vmatpush1.msra.mxu0 0.0
    %1608 = vmatprep.subr.mxu0 0.0
    %1609 = vmatpush1.msra.mxu0 0.0
    %1610 = vmatprep.subr.mxu0 0.0
    %1611 = vmatpush1.msra.mxu0 0.0
    %1612 = vmatprep.subr.mxu0 0.0
    %1613 = vmatpush1.msra.mxu0 0.0
    %1614 = vmatprep.subr.mxu0 0.0
    %1615 = vmatpush1.msra.mxu0 0.0
    %1616 = vmatprep.mubr.f32.mxu0 0.0
    %1617 = vmatmul.mubr.f32.gmra.mrb[0].mxu0 %v1547
    %v1618 = vpop.f32.mrb[0].mxu0
    %v1619 = vadd.f32 0.0, %v1618
    %v1620 = vpop.f32.mrb[0].mxu0
    %1621 = vmatprep.mubr.f32.mxu0 0.0
    %1622 = vmatmul.mubr.f32.gmra.mrb[0].mxu0 %v1550
    %v1623 = vpop.f32.mrb[0].mxu0
    %v1624 = vadd.f32 0.0, %v1623
    %v1625 = vpop.f32.mrb[0].mxu0
    %1626 = vdwg.mxu0
    %1627 = vrot.lane.b32.xlu0 %v315, 80
    %v1628 = vpop.permute.xlu0 %1627
    %1629 = vrot.lane.b32.xlu0 %v320, 80
    %v1630 = vpop.permute.xlu0 %1629
    %v1634 = vsel %vm498, %v1538, 0
    %v1637 = vsel %vm498, %v1539, 0
    %1639 = vmatprep.subr.mxu0 0.0
    %1640 = vmatpush1.msra.mxu0 %v1628
    %1641 = vmatprep.subr.mxu0 0.0
    %1642 = vmatpush1.msra.mxu0 %v1630
    %1643 = vmatprep.subr.mxu0 0.0
    %1644 = vmatpush1.msra.mxu0 0.0
    %1645 = vmatprep.subr.mxu0 0.0
    %1646 = vmatpush1.msra.mxu0 0.0
    %1647 = vmatprep.subr.mxu0 0.0
    %1648 = vmatpush1.msra.mxu0 0.0
    %1649 = vmatprep.subr.mxu0 0.0
    %1650 = vmatpush1.msra.mxu0 0.0
    %1651 = vmatprep.subr.mxu0 0.0
    %1652 = vmatpush1.msra.mxu0 0.0
    %1653 = vmatprep.subr.mxu0 0.0
    %1654 = vmatpush1.msra.mxu0 0.0
    %1655 = vmatprep.subr.mxu0 0.0
    %1656 = vmatpush1.msra.mxu0 0.0
    %1657 = vmatprep.subr.mxu0 0.0
    %1658 = vmatpush1.msra.mxu0 0.0
    %1659 = vmatprep.subr.mxu0 0.0
    %1660 = vmatpush1.msra.mxu0 0.0
    %1661 = vmatprep.subr.mxu0 0.0
    %1662 = vmatpush1.msra.mxu0 0.0
    %1663 = vmatprep.subr.mxu0 0.0
    %1664 = vmatpush1.msra.mxu0 0.0
    %1665 = vmatprep.subr.mxu0 0.0
    %1666 = vmatpush1.msra.mxu0 0.0
    %1667 = vmatprep.subr.mxu0 0.0
    %1668 = vmatpush1.msra.mxu0 0.0
    %1669 = vmatprep.subr.mxu0 0.0
    %1670 = vmatpush1.msra.mxu0 0.0
    %1671 = vmatprep.subr.mxu0 0.0
    %1672 = vmatpush1.msra.mxu0 0.0
    %1673 = vmatprep.subr.mxu0 0.0
    %1674 = vmatpush1.msra.mxu0 0.0
    %1675 = vmatprep.subr.mxu0 0.0
    %1676 = vmatpush1.msra.mxu0 0.0
    %1677 = vmatprep.subr.mxu0 0.0
    %1678 = vmatpush1.msra.mxu0 0.0
    %1679 = vmatprep.subr.mxu0 0.0
    %1680 = vmatpush1.msra.mxu0 0.0
    %1681 = vmatprep.subr.mxu0 0.0
    %1682 = vmatpush1.msra.mxu0 0.0
    %1683 = vmatprep.subr.mxu0 0.0
    %1684 = vmatpush1.msra.mxu0 0.0
    %1685 = vmatprep.subr.mxu0 0.0
    %1686 = vmatpush1.msra.mxu0 0.0
    %1687 = vmatprep.subr.mxu0 0.0
    %1688 = vmatpush1.msra.mxu0 0.0
    %1689 = vmatprep.subr.mxu0 0.0
    %1690 = vmatpush1.msra.mxu0 0.0
    %1691 = vmatprep.subr.mxu0 0.0
    %1692 = vmatpush1.msra.mxu0 0.0
    %1693 = vmatprep.subr.mxu0 0.0
    %1694 = vmatpush1.msra.mxu0 0.0
    %1695 = vmatprep.subr.mxu0 0.0
    %1696 = vmatpush1.msra.mxu0 0.0
    %1697 = vmatprep.subr.mxu0 0.0
    %1698 = vmatpush1.msra.mxu0 0.0
    %1699 = vmatprep.subr.mxu0 0.0
    %1700 = vmatpush1.msra.mxu0 0.0
    %1701 = vmatprep.subr.mxu0 0.0
    %1702 = vmatpush1.msra.mxu0 0.0
    %1703 = vmatprep.mubr.f32.mxu0 0.0
    %1704 = vmatmul.mubr.f32.gmra.mrb[0].mxu0 %v1634
    %v1705 = vpop.f32.mrb[0].mxu0
    %v1706 = vadd.f32 0.0, %v1705
    %v1707 = vpop.f32.mrb[0].mxu0
    %1708 = vmatprep.mubr.f32.mxu0 0.0
    %1709 = vmatmul.mubr.f32.gmra.mrb[0].mxu0 %v1637
    %v1710 = vpop.f32.mrb[0].mxu0
    %v1711 = vadd.f32 0.0, %v1710
    %v1712 = vpop.f32.mrb[0].mxu0
    %1713 = vdwg.mxu0
    %s1714 = scalar_lea.vmem [#allocation10], 16
    %v1715 = vld [vmem:[%s1714] sm:$0xff]
    %v1717 = vsel %vm323, %v1619, 0
    %v1720 = vsel %vm323, %v1624, 0
    %v1723 = vsel %vm323, %v1706, 0
    %v1726 = vsel %vm323, %v1711, 0
    %1728 = vmatprep.subr.mxu0 0.0
    %1729 = vmatpush1.msra.mxu0 %v1715
    %1730 = vmatprep.subr.mxu0 0.0
    %1731 = vmatpush1.msra.mxu0 0.0
    %1732 = vmatprep.subr.mxu0 0.0
    %1733 = vmatpush1.msra.mxu0 0.0
    %1734 = vmatprep.subr.mxu0 0.0
    %1735 = vmatpush1.msra.mxu0 0.0
    %1736 = vmatprep.subr.mxu0 0.0
    %1737 = vmatpush1.msra.mxu0 0.0
    %1738 = vmatprep.subr.mxu0 0.0
    %1739 = vmatpush1.msra.mxu0 0.0
    %1740 = vmatprep.subr.mxu0 0.0
    %1741 = vmatpush1.msra.mxu0 0.0
    %1742 = vmatprep.subr.mxu0 0.0
    %1743 = vmatpush1.msra.mxu0 0.0
    %1744 = vmatprep.subr.mxu0 0.0
    %1745 = vmatpush1.msra.mxu0 0.0
    %1746 = vmatprep.subr.mxu0 0.0
    %1747 = vmatpush1.msra.mxu0 0.0
    %1748 = vmatprep.subr.mxu0 0.0
    %1749 = vmatpush1.msra.mxu0 0.0
    %1750 = vmatprep.subr.mxu0 0.0
    %1751 = vmatpush1.msra.mxu0 0.0
    %1752 = vmatprep.subr.mxu0 0.0
    %1753 = vmatpush1.msra.mxu0 0.0
    %1754 = vmatprep.subr.mxu0 0.0
    %1755 = vmatpush1.msra.mxu0 0.0
    %1756 = vmatprep.subr.mxu0 0.0
    %1757 = vmatpush1.msra.mxu0 0.0
    %1758 = vmatprep.subr.mxu0 0.0
    %1759 = vmatpush1.msra.mxu0 0.0
    %1760 = vmatprep.subr.mxu0 0.0
    %1761 = vmatpush1.msra.mxu0 0.0
    %1762 = vmatprep.subr.mxu0 0.0
    %1763 = vmatpush1.msra.mxu0 0.0
    %1764 = vmatprep.subr.mxu0 0.0
    %1765 = vmatpush1.msra.mxu0 0.0
    %1766 = vmatprep.subr.mxu0 0.0
    %1767 = vmatpush1.msra.mxu0 0.0
    %1768 = vmatprep.subr.mxu0 0.0
    %1769 = vmatpush1.msra.mxu0 0.0
    %1770 = vmatprep.subr.mxu0 0.0
    %1771 = vmatpush1.msra.mxu0 0.0
    %1772 = vmatprep.subr.mxu0 0.0
    %1773 = vmatpush1.msra.mxu0 0.0
    %1774 = vmatprep.subr.mxu0 0.0
    %1775 = vmatpush1.msra.mxu0 0.0
    %1776 = vmatprep.subr.mxu0 0.0
    %1777 = vmatpush1.msra.mxu0 0.0
    %1778 = vmatprep.subr.mxu0 0.0
    %1779 = vmatpush1.msra.mxu0 0.0
    %1780 = vmatprep.subr.mxu0 0.0
    %1781 = vmatpush1.msra.mxu0 0.0
    %1782 = vmatprep.subr.mxu0 0.0
    %1783 = vmatpush1.msra.mxu0 0.0
    %1784 = vmatprep.subr.mxu0 0.0
    %1785 = vmatpush1.msra.mxu0 0.0
    %1786 = vmatprep.subr.mxu0 0.0
    %1787 = vmatpush1.msra.mxu0 0.0
    %1788 = vmatprep.subr.mxu0 0.0
    %1789 = vmatpush1.msra.mxu0 0.0
    %1790 = vmatprep.subr.mxu0 0.0
    %1791 = vmatpush1.msra.mxu0 0.0
    %1792 = vmatprep.mubr.f32.mxu0 0.0
    %1793 = vmatmul.mubr.f32.gmra.mrb[0].mxu0 %v1717
    %v1794 = vpop.f32.mrb[0].mxu0
    %v1795 = vadd.f32 0.0, %v1794
    %v1796 = vpop.f32.mrb[0].mxu0
    %1797 = vmatprep.mubr.f32.mxu0 0.0
    %1798 = vmatmul.mubr.f32.gmra.mrb[0].mxu0 %v1720
    %v1799 = vpop.f32.mrb[0].mxu0
    %v1800 = vadd.f32 0.0, %v1799
    %v1801 = vpop.f32.mrb[0].mxu0
    %1802 = vmatprep.mubr.f32.mxu0 0.0
    %1803 = vmatmul.mubr.f32.gmra.mrb[0].mxu0 %v1723
    %v1804 = vpop.f32.mrb[0].mxu0
    %v1805 = vadd.f32 0.0, %v1804
    %v1806 = vpop.f32.mrb[0].mxu0
    %1807 = vmatprep.mubr.f32.mxu0 0.0
    %1808 = vmatmul.mubr.f32.gmra.mrb[0].mxu0 %v1726
    %v1809 = vpop.f32.mrb[0].mxu0
    %v1810 = vadd.f32 0.0, %v1809
    %v1811 = vpop.f32.mrb[0].mxu0
    %1812 = vdwg.mxu0
    %v1813 = vadd.f32 %v1296, %v1795
    %v1814 = vadd.f32 %v1301, %v1800
    %v1815 = vadd.f32 %v1306, %v1805
    %v1816 = vadd.f32 %v1311, %v1810
    %1817 = vrot.lane.b32.xlu0 %v197, 104
    %v1818 = vpop.permute.xlu0 %1817
    %1819 = vrot.lane.b32.xlu0 %v202, 104
    %v1820 = vpop.permute.xlu0 %1819
    %1821 = vrot.lane.b32.xlu0 %v305, 104
    %v1822 = vpop.permute.xlu0 %1821
    %1823 = vrot.lane.b32.xlu0 %v310, 104
    %v1824 = vpop.permute.xlu0 %1823
    %v1825 = vsel %vm323, %v1818, 0
    %v1827 = vsel %vm323, %v1820, 0
    %v1829 = vsel %vm323, %v1822, 0
    %v1831 = vsel %vm323, %v1824, 0
    %1833 = vmatprep.subr.mxu0 0.0
    %1834 = vmatpush1.xpose.msra.mxu0 %v1829
    %1835 = vmatprep.subr.mxu0 0.0
    %1836 = vmatpush1.xpose.msra.mxu0 %v1831
    %1837 = vmatprep.subr.mxu0 0.0
    %1838 = vmatpush1.xpose.msra.mxu0 0.0
    %1839 = vmatprep.subr.mxu0 0.0
    %1840 = vmatpush1.xpose.msra.mxu0 0.0
    %1841 = vmatprep.subr.mxu0 0.0
    %1842 = vmatpush1.xpose.msra.mxu0 0.0
    %1843 = vmatprep.subr.mxu0 0.0
    %1844 = vmatpush1.xpose.msra.mxu0 0.0
    %1845 = vmatprep.subr.mxu0 0.0
    %1846 = vmatpush1.xpose.msra.mxu0 0.0
    %1847 = vmatprep.subr.mxu0 0.0
    %1848 = vmatpush1.xpose.msra.mxu0 0.0
    %1849 = vmatprep.subr.mxu0 0.0
    %1850 = vmatpush1.xpose.msra.mxu0 0.0
    %1851 = vmatprep.subr.mxu0 0.0
    %1852 = vmatpush1.xpose.msra.mxu0 0.0
    %1853 = vmatprep.subr.mxu0 0.0
    %1854 = vmatpush1.xpose.msra.mxu0 0.0
    %1855 = vmatprep.subr.mxu0 0.0
    %1856 = vmatpush1.xpose.msra.mxu0 0.0
    %1857 = vmatprep.subr.mxu0 0.0
    %1858 = vmatpush1.xpose.msra.mxu0 0.0
    %1859 = vmatprep.subr.mxu0 0.0
    %1860 = vmatpush1.xpose.msra.mxu0 0.0
    %1861 = vmatprep.subr.mxu0 0.0
    %1862 = vmatpush1.xpose.msra.mxu0 0.0
    %1863 = vmatprep.subr.mxu0 0.0
    %1864 = vmatpush1.xpose.msra.mxu0 0.0
    %1865 = vmatprep.subr.mxu0 0.0
    %1866 = vmatpush1.xpose.msra.mxu0 0.0
    %1867 = vmatprep.subr.mxu0 0.0
    %1868 = vmatpush1.xpose.msra.mxu0 0.0
    %1869 = vmatprep.subr.mxu0 0.0
    %1870 = vmatpush1.xpose.msra.mxu0 0.0
    %1871 = vmatprep.subr.mxu0 0.0
    %1872 = vmatpush1.xpose.msra.mxu0 0.0
    %1873 = vmatprep.subr.mxu0 0.0
    %1874 = vmatpush1.xpose.msra.mxu0 0.0
    %1875 = vmatprep.subr.mxu0 0.0
    %1876 = vmatpush1.xpose.msra.mxu0 0.0
    %1877 = vmatprep.subr.mxu0 0.0
    %1878 = vmatpush1.xpose.msra.mxu0 0.0
    %1879 = vmatprep.subr.mxu0 0.0
    %1880 = vmatpush1.xpose.msra.mxu0 0.0
    %1881 = vmatprep.subr.mxu0 0.0
    %1882 = vmatpush1.xpose.msra.mxu0 0.0
    %1883 = vmatprep.subr.mxu0 0.0
    %1884 = vmatpush1.xpose.msra.mxu0 0.0
    %1885 = vmatprep.subr.mxu0 0.0
    %1886 = vmatpush1.xpose.msra.mxu0 0.0
    %1887 = vmatprep.subr.mxu0 0.0
    %1888 = vmatpush1.xpose.msra.mxu0 0.0
    %1889 = vmatprep.subr.mxu0 0.0
    %1890 = vmatpush1.xpose.msra.mxu0 0.0
    %1891 = vmatprep.subr.mxu0 0.0
    %1892 = vmatpush1.xpose.msra.mxu0 0.0
    %1893 = vmatprep.subr.mxu0 0.0
    %1894 = vmatpush1.xpose.msra.mxu0 0.0
    %1895 = vmatprep.subr.mxu0 0.0
    %1896 = vmatpush1.xpose.msra.mxu0 0.0
    %1897 = vmatprep.mubr.f32.mxu0 0.0
    %1898 = vmatmul.mubr.f32.gmra.mrb[0].mxu0 %v1825
    %v1899 = vpop.f32.mrb[0].mxu0
    %v1900 = vadd.f32 0.0, %v1899
    %v1901 = vpop.f32.mrb[0].mxu0
    %1902 = vmatprep.mubr.f32.mxu0 0.0
    %1903 = vmatmul.mubr.f32.gmra.mrb[0].mxu0 %v1827
    %v1904 = vpop.f32.mrb[0].mxu0
    %v1905 = vadd.f32 0.0, %v1904
    %v1906 = vpop.f32.mrb[0].mxu0
    %1907 = vdwg.mxu0
    %1908 = vrot.lane.b32.xlu0 %v207, 104
    %v1909 = vpop.permute.xlu0 %1908
    %1910 = vrot.lane.b32.xlu0 %v212, 104
    %v1911 = vpop.permute.xlu0 %1910
    %1912 = vrot.lane.b32.xlu0 %v315, 104
    %v1913 = vpop.permute.xlu0 %1912
    %1914 = vrot.lane.b32.xlu0 %v320, 104
    %v1915 = vpop.permute.xlu0 %1914
    %v1916 = vsel %vm323, %v1909, 0
    %v1918 = vsel %vm323, %v1911, 0
    %v1920 = vsel %vm323, %v1913, 0
    %v1922 = vsel %vm323, %v1915, 0
    %1924 = vmatprep.subr.mxu0 0.0
    %1925 = vmatpush1.xpose.msra.mxu0 %v1920
    %1926 = vmatprep.subr.mxu0 0.0
    %1927 = vmatpush1.xpose.msra.mxu0 %v1922
    %1928 = vmatprep.subr.mxu0 0.0
    %1929 = vmatpush1.xpose.msra.mxu0 0.0
    %1930 = vmatprep.subr.mxu0 0.0
    %1931 = vmatpush1.xpose.msra.mxu0 0.0
    %1932 = vmatprep.subr.mxu0 0.0
    %1933 = vmatpush1.xpose.msra.mxu0 0.0
    %1934 = vmatprep.subr.mxu0 0.0
    %1935 = vmatpush1.xpose.msra.mxu0 0.0
    %1936 = vmatprep.subr.mxu0 0.0
    %1937 = vmatpush1.xpose.msra.mxu0 0.0
    %1938 = vmatprep.subr.mxu0 0.0
    %1939 = vmatpush1.xpose.msra.mxu0 0.0
    %1940 = vmatprep.subr.mxu0 0.0
    %1941 = vmatpush1.xpose.msra.mxu0 0.0
    %1942 = vmatprep.subr.mxu0 0.0
    %1943 = vmatpush1.xpose.msra.mxu0 0.0
    %1944 = vmatprep.subr.mxu0 0.0
    %1945 = vmatpush1.xpose.msra.mxu0 0.0
    %1946 = vmatprep.subr.mxu0 0.0
    %1947 = vmatpush1.xpose.msra.mxu0 0.0
    %1948 = vmatprep.subr.mxu0 0.0
    %1949 = vmatpush1.xpose.msra.mxu0 0.0
    %1950 = vmatprep.subr.mxu0 0.0
    %1951 = vmatpush1.xpose.msra.mxu0 0.0
    %1952 = vmatprep.subr.mxu0 0.0
    %1953 = vmatpush1.xpose.msra.mxu0 0.0
    %1954 = vmatprep.subr.mxu0 0.0
    %1955 = vmatpush1.xpose.msra.mxu0 0.0
    %1956 = vmatprep.subr.mxu0 0.0
    %1957 = vmatpush1.xpose.msra.mxu0 0.0
    %1958 = vmatprep.subr.mxu0 0.0
    %1959 = vmatpush1.xpose.msra.mxu0 0.0
    %1960 = vmatprep.subr.mxu0 0.0
    %1961 = vmatpush1.xpose.msra.mxu0 0.0
    %1962 = vmatprep.subr.mxu0 0.0
    %1963 = vmatpush1.xpose.msra.mxu0 0.0
    %1964 = vmatprep.subr.mxu0 0.0
    %1965 = vmatpush1.xpose.msra.mxu0 0.0
    %1966 = vmatprep.subr.mxu0 0.0
    %1967 = vmatpush1.xpose.msra.mxu0 0.0
    %1968 = vmatprep.subr.mxu0 0.0
    %1969 = vmatpush1.xpose.msra.mxu0 0.0
    %1970 = vmatprep.subr.mxu0 0.0
    %1971 = vmatpush1.xpose.msra.mxu0 0.0
    %1972 = vmatprep.subr.mxu0 0.0
    %1973 = vmatpush1.xpose.msra.mxu0 0.0
    %1974 = vmatprep.subr.mxu0 0.0
    %1975 = vmatpush1.xpose.msra.mxu0 0.0
    %1976 = vmatprep.subr.mxu0 0.0
    %1977 = vmatpush1.xpose.msra.mxu0 0.0
    %1978 = vmatprep.subr.mxu0 0.0
    %1979 = vmatpush1.xpose.msra.mxu0 0.0
    %1980 = vmatprep.subr.mxu0 0.0
    %1981 = vmatpush1.xpose.msra.mxu0 0.0
    %1982 = vmatprep.subr.mxu0 0.0
    %1983 = vmatpush1.xpose.msra.mxu0 0.0
    %1984 = vmatprep.subr.mxu0 0.0
    %1985 = vmatpush1.xpose.msra.mxu0 0.0
    %1986 = vmatprep.subr.mxu0 0.0
    %1987 = vmatpush1.xpose.msra.mxu0 0.0
    %1988 = vmatprep.mubr.f32.mxu0 0.0
    %1989 = vmatmul.mubr.f32.gmra.mrb[0].mxu0 %v1916
    %v1990 = vpop.f32.mrb[0].mxu0
    %v1991 = vadd.f32 0.0, %v1990
    %v1992 = vpop.f32.mrb[0].mxu0
    %1993 = vmatprep.mubr.f32.mxu0 0.0
    %1994 = vmatmul.mubr.f32.gmra.mrb[0].mxu0 %v1918
    %v1995 = vpop.f32.mrb[0].mxu0
    %v1996 = vadd.f32 0.0, %v1995
    %v1997 = vpop.f32.mrb[0].mxu0
    %1998 = vdwg.mxu0
    %v1999 = vsel %vm498, %v1900, -inf
    %2000 = vmax.xlane.f32.xlu0 %v1999
    %v2001 = vpop.xlane.xlu0 %2000
    %v2002 = vsel %vm498, %v1905, -inf
    %2003 = vmax.xlane.f32.xlu0 %v2002
    %v2004 = vpop.xlane.xlu0 %2003
    %v2005 = vsel %vm498, %v1991, -inf
    %2006 = vmax.xlane.f32.xlu0 %v2005
    %v2007 = vpop.xlane.xlu0 %2006
    %v2008 = vsel %vm498, %v1996, -inf
    %2009 = vmax.xlane.f32.xlu0 %v2008
    %v2010 = vpop.xlane.xlu0 %2009
    %v2011 = vsub.f32 %v1900, %v2001
    %v2012 = vsub.f32 %v1905, %v2004
    %v2013 = vsub.f32 %v1991, %v2007
    %v2014 = vsub.f32 %v1996, %v2010
    %v2015 = vmul.f32 %v2011, 1.442695
    %v2016 = vpow.pop %v2015
    %v2017 = vmul.f32 %v2012, 1.442695
    %v2018 = vpow.pop %v2017
    %v2019 = vmul.f32 %v2013, 1.442695
    %v2020 = vpow.pop %v2019
    %v2021 = vmul.f32 %v2014, 1.442695
    %v2022 = vpow.pop %v2021
    %v2023 = vsel %vm498, %v2016, 0.0
    %2024 = vadd.xlane.f32.xlu0 %v2023
    %v2025 = vpop.xlane.xlu0 %2024
    %v2026 = vsel %vm498, %v2018, 0.0
    %2027 = vadd.xlane.f32.xlu0 %v2026
    %v2028 = vpop.xlane.xlu0 %2027
    %v2029 = vsel %vm498, %v2020, 0.0
    %2030 = vadd.xlane.f32.xlu0 %v2029
    %v2031 = vpop.xlane.xlu0 %2030
    %v2032 = vsel %vm498, %v2022, 0.0
    %2033 = vadd.xlane.f32.xlu0 %v2032
    %v2034 = vpop.xlane.xlu0 %2033
    %v2035 = vrcp.pop %v2025
    %v2036 = vrcp.pop %v2028
    %v2037 = vrcp.pop %v2031
    %v2038 = vrcp.pop %v2034
    %v2039 = vmul.f32 %v2016, %v2035
    %v2040 = vmul.f32 %v2018, %v2036
    %v2041 = vmul.f32 %v2020, %v2037
    %v2042 = vmul.f32 %v2022, %v2038
    %2043 = vrot.lane.b32.xlu0 %v305, 72
    %v2044 = vpop.permute.xlu0 %2043
    %2045 = vrot.lane.b32.xlu0 %v310, 72
    %v2046 = vpop.permute.xlu0 %2045
    %v2050 = vsel %vm498, %v2039, 0
    %v2053 = vsel %vm498, %v2040, 0
    %2055 = vmatprep.subr.mxu0 0.0
    %2056 = vmatpush1.msra.mxu0 %v2044
    %2057 = vmatprep.subr.mxu0 0.0
    %2058 = vmatpush1.msra.mxu0 %v2046
    %2059 = vmatprep.subr.mxu0 0.0
    %2060 = vmatpush1.msra.mxu0 0.0
    %2061 = vmatprep.subr.mxu0 0.0
    %2062 = vmatpush1.msra.mxu0 0.0
    %2063 = vmatprep.subr.mxu0 0.0
    %2064 = vmatpush1.msra.mxu0 0.0
    %2065 = vmatprep.subr.mxu0 0.0
    %2066 = vmatpush1.msra.mxu0 0.0
    %2067 = vmatprep.subr.mxu0 0.0
    %2068 = vmatpush1.msra.mxu0 0.0
    %2069 = vmatprep.subr.mxu0 0.0
    %2070 = vmatpush1.msra.mxu0 0.0
    %2071 = vmatprep.subr.mxu0 0.0
    %2072 = vmatpush1.msra.mxu0 0.0
    %2073 = vmatprep.subr.mxu0 0.0
    %2074 = vmatpush1.msra.mxu0 0.0
    %2075 = vmatprep.subr.mxu0 0.0
    %2076 = vmatpush1.msra.mxu0 0.0
    %2077 = vmatprep.subr.mxu0 0.0
    %2078 = vmatpush1.msra.mxu0 0.0
    %2079 = vmatprep.subr.mxu0 0.0
    %2080 = vmatpush1.msra.mxu0 0.0
    %2081 = vmatprep.subr.mxu0 0.0
    %2082 = vmatpush1.msra.mxu0 0.0
    %2083 = vmatprep.subr.mxu0 0.0
    %2084 = vmatpush1.msra.mxu0 0.0
    %2085 = vmatprep.subr.mxu0 0.0
    %2086 = vmatpush1.msra.mxu0 0.0
    %2087 = vmatprep.subr.mxu0 0.0
    %2088 = vmatpush1.msra.mxu0 0.0
    %2089 = vmatprep.subr.mxu0 0.0
    %2090 = vmatpush1.msra.mxu0 0.0
    %2091 = vmatprep.subr.mxu0 0.0
    %2092 = vmatpush1.msra.mxu0 0.0
    %2093 = vmatprep.subr.mxu0 0.0
    %2094 = vmatpush1.msra.mxu0 0.0
    %2095 = vmatprep.subr.mxu0 0.0
    %2096 = vmatpush1.msra.mxu0 0.0
    %2097 = vmatprep.subr.mxu0 0.0
    %2098 = vmatpush1.msra.mxu0 0.0
    %2099 = vmatprep.subr.mxu0 0.0
    %2100 = vmatpush1.msra.mxu0 0.0
    %2101 = vmatprep.subr.mxu0 0.0
    %2102 = vmatpush1.msra.mxu0 0.0
    %2103 = vmatprep.subr.mxu0 0.0
    %2104 = vmatpush1.msra.mxu0 0.0
    %2105 = vmatprep.subr.mxu0 0.0
    %2106 = vmatpush1.msra.mxu0 0.0
    %2107 = vmatprep.subr.mxu0 0.0
    %2108 = vmatpush1.msra.mxu0 0.0
    %2109 = vmatprep.subr.mxu0 0.0
    %2110 = vmatpush1.msra.mxu0 0.0
    %2111 = vmatprep.subr.mxu0 0.0
    %2112 = vmatpush1.msra.mxu0 0.0
    %2113 = vmatprep.subr.mxu0 0.0
    %2114 = vmatpush1.msra.mxu0 0.0
    %2115 = vmatprep.subr.mxu0 0.0
    %2116 = vmatpush1.msra.mxu0 0.0
    %2117 = vmatprep.subr.mxu0 0.0
    %2118 = vmatpush1.msra.mxu0 0.0
    %2119 = vmatprep.mubr.f32.mxu0 0.0
    %2120 = vmatmul.mubr.f32.gmra.mrb[0].mxu0 %v2050
    %v2121 = vpop.f32.mrb[0].mxu0
    %v2122 = vadd.f32 0.0, %v2121
    %v2123 = vpop.f32.mrb[0].mxu0
    %2124 = vmatprep.mubr.f32.mxu0 0.0
    %2125 = vmatmul.mubr.f32.gmra.mrb[0].mxu0 %v2053
    %v2126 = vpop.f32.mrb[0].mxu0
    %v2127 = vadd.f32 0.0, %v2126
    %v2128 = vpop.f32.mrb[0].mxu0
    %2129 = vdwg.mxu0
    %2130 = vrot.lane.b32.xlu0 %v315, 72
    %v2131 = vpop.permute.xlu0 %2130
    %2132 = vrot.lane.b32.xlu0 %v320, 72
    %v2133 = vpop.permute.xlu0 %2132
    %v2137 = vsel %vm498, %v2041, 0
    %v2140 = vsel %vm498, %v2042, 0
    %2142 = vmatprep.subr.mxu0 0.0
    %2143 = vmatpush1.msra.mxu0 %v2131
    %2144 = vmatprep.subr.mxu0 0.0
    %2145 = vmatpush1.msra.mxu0 %v2133
    %2146 = vmatprep.subr.mxu0 0.0
    %2147 = vmatpush1.msra.mxu0 0.0
    %2148 = vmatprep.subr.mxu0 0.0
    %2149 = vmatpush1.msra.mxu0 0.0
    %2150 = vmatprep.subr.mxu0 0.0
    %2151 = vmatpush1.msra.mxu0 0.0
    %2152 = vmatprep.subr.mxu0 0.0
    %2153 = vmatpush1.msra.mxu0 0.0
    %2154 = vmatprep.subr.mxu0 0.0
    %2155 = vmatpush1.msra.mxu0 0.0
    %2156 = vmatprep.subr.mxu0 0.0
    %2157 = vmatpush1.msra.mxu0 0.0
    %2158 = vmatprep.subr.mxu0 0.0
    %2159 = vmatpush1.msra.mxu0 0.0
    %2160 = vmatprep.subr.mxu0 0.0
    %2161 = vmatpush1.msra.mxu0 0.0
    %2162 = vmatprep.subr.mxu0 0.0
    %2163 = vmatpush1.msra.mxu0 0.0
    %2164 = vmatprep.subr.mxu0 0.0
    %2165 = vmatpush1.msra.mxu0 0.0
    %2166 = vmatprep.subr.mxu0 0.0
    %2167 = vmatpush1.msra.mxu0 0.0
    %2168 = vmatprep.subr.mxu0 0.0
    %2169 = vmatpush1.msra.mxu0 0.0
    %2170 = vmatprep.subr.mxu0 0.0
    %2171 = vmatpush1.msra.mxu0 0.0
    %2172 = vmatprep.subr.mxu0 0.0
    %2173 = vmatpush1.msra.mxu0 0.0
    %2174 = vmatprep.subr.mxu0 0.0
    %2175 = vmatpush1.msra.mxu0 0.0
    %2176 = vmatprep.subr.mxu0 0.0
    %2177 = vmatpush1.msra.mxu0 0.0
    %2178 = vmatprep.subr.mxu0 0.0
    %2179 = vmatpush1.msra.mxu0 0.0
    %2180 = vmatprep.subr.mxu0 0.0
    %2181 = vmatpush1.msra.mxu0 0.0
    %2182 = vmatprep.subr.mxu0 0.0
    %2183 = vmatpush1.msra.mxu0 0.0
    %2184 = vmatprep.subr.mxu0 0.0
    %2185 = vmatpush1.msra.mxu0 0.0
    %2186 = vmatprep.subr.mxu0 0.0
    %2187 = vmatpush1.msra.mxu0 0.0
    %2188 = vmatprep.subr.mxu0 0.0
    %2189 = vmatpush1.msra.mxu0 0.0
    %2190 = vmatprep.subr.mxu0 0.0
    %2191 = vmatpush1.msra.mxu0 0.0
    %2192 = vmatprep.subr.mxu0 0.0
    %2193 = vmatpush1.msra.mxu0 0.0
    %2194 = vmatprep.subr.mxu0 0.0
    %2195 = vmatpush1.msra.mxu0 0.0
    %2196 = vmatprep.subr.mxu0 0.0
    %2197 = vmatpush1.msra.mxu0 0.0
    %2198 = vmatprep.subr.mxu0 0.0
    %2199 = vmatpush1.msra.mxu0 0.0
    %2200 = vmatprep.subr.mxu0 0.0
    %2201 = vmatpush1.msra.mxu0 0.0
    %2202 = vmatprep.subr.mxu0 0.0
    %2203 = vmatpush1.msra.mxu0 0.0
    %2204 = vmatprep.subr.mxu0 0.0
    %2205 = vmatpush1.msra.mxu0 0.0
    %2206 = vmatprep.mubr.f32.mxu0 0.0
    %2207 = vmatmul.mubr.f32.gmra.mrb[0].mxu0 %v2137
    %v2208 = vpop.f32.mrb[0].mxu0
    %v2209 = vadd.f32 0.0, %v2208
    %v2210 = vpop.f32.mrb[0].mxu0
    %2211 = vmatprep.mubr.f32.mxu0 0.0
    %2212 = vmatmul.mubr.f32.gmra.mrb[0].mxu0 %v2140
    %v2213 = vpop.f32.mrb[0].mxu0
    %v2214 = vadd.f32 0.0, %v2213
    %v2215 = vpop.f32.mrb[0].mxu0
    %2216 = vdwg.mxu0
    %s2217 = scalar_lea.vmem [#allocation10], 24
    %v2218 = vld [vmem:[%s2217] sm:$0xff]
    %v2220 = vsel %vm323, %v2122, 0
    %v2223 = vsel %vm323, %v2127, 0
    %v2226 = vsel %vm323, %v2209, 0
    %v2229 = vsel %vm323, %v2214, 0
    %2231 = vmatprep.subr.mxu0 0.0
    %2232 = vmatpush1.msra.mxu0 %v2218
    %2233 = vmatprep.subr.mxu0 0.0
    %2234 = vmatpush1.msra.mxu0 0.0
    %2235 = vmatprep.subr.mxu0 0.0
    %2236 = vmatpush1.msra.mxu0 0.0
    %2237 = vmatprep.subr.mxu0 0.0
    %2238 = vmatpush1.msra.mxu0 0.0
    %2239 = vmatprep.subr.mxu0 0.0
    %2240 = vmatpush1.msra.mxu0 0.0
    %2241 = vmatprep.subr.mxu0 0.0
    %2242 = vmatpush1.msra.mxu0 0.0
    %2243 = vmatprep.subr.mxu0 0.0
    %2244 = vmatpush1.msra.mxu0 0.0
    %2245 = vmatprep.subr.mxu0 0.0
    %2246 = vmatpush1.msra.mxu0 0.0
    %2247 = vmatprep.subr.mxu0 0.0
    %2248 = vmatpush1.msra.mxu0 0.0
    %2249 = vmatprep.subr.mxu0 0.0
    %2250 = vmatpush1.msra.mxu0 0.0
    %2251 = vmatprep.subr.mxu0 0.0
    %2252 = vmatpush1.msra.mxu0 0.0
    %2253 = vmatprep.subr.mxu0 0.0
    %2254 = vmatpush1.msra.mxu0 0.0
    %2255 = vmatprep.subr.mxu0 0.0
    %2256 = vmatpush1.msra.mxu0 0.0
    %2257 = vmatprep.subr.mxu0 0.0
    %2258 = vmatpush1.msra.mxu0 0.0
    %2259 = vmatprep.subr.mxu0 0.0
    %2260 = vmatpush1.msra.mxu0 0.0
    %2261 = vmatprep.subr.mxu0 0.0
    %2262 = vmatpush1.msra.mxu0 0.0
    %2263 = vmatprep.subr.mxu0 0.0
    %2264 = vmatpush1.msra.mxu0 0.0
    %2265 = vmatprep.subr.mxu0 0.0
    %2266 = vmatpush1.msra.mxu0 0.0
    %2267 = vmatprep.subr.mxu0 0.0
    %2268 = vmatpush1.msra.mxu0 0.0
    %2269 = vmatprep.subr.mxu0 0.0
    %2270 = vmatpush1.msra.mxu0 0.0
    %2271 = vmatprep.subr.mxu0 0.0
    %2272 = vmatpush1.msra.mxu0 0.0
    %2273 = vmatprep.subr.mxu0 0.0
    %2274 = vmatpush1.msra.mxu0 0.0
    %2275 = vmatprep.subr.mxu0 0.0
    %2276 = vmatpush1.msra.mxu0 0.0
    %2277 = vmatprep.subr.mxu0 0.0
    %2278 = vmatpush1.msra.mxu0 0.0
    %2279 = vmatprep.subr.mxu0 0.0
    %2280 = vmatpush1.msra.mxu0 0.0
    %2281 = vmatprep.subr.mxu0 0.0
    %2282 = vmatpush1.msra.mxu0 0.0
    %2283 = vmatprep.subr.mxu0 0.0
    %2284 = vmatpush1.msra.mxu0 0.0
    %2285 = vmatprep.subr.mxu0 0.0
    %2286 = vmatpush1.msra.mxu0 0.0
    %2287 = vmatprep.subr.mxu0 0.0
    %2288 = vmatpush1.msra.mxu0 0.0
    %2289 = vmatprep.subr.mxu0 0.0
    %2290 = vmatpush1.msra.mxu0 0.0
    %2291 = vmatprep.subr.mxu0 0.0
    %2292 = vmatpush1.msra.mxu0 0.0
    %2293 = vmatprep.subr.mxu0 0.0
    %2294 = vmatpush1.msra.mxu0 0.0
    %2295 = vmatprep.mubr.f32.mxu0 0.0
    %2296 = vmatmul.mubr.f32.gmra.mrb[0].mxu0 %v2220
    %v2297 = vpop.f32.mrb[0].mxu0
    %v2298 = vadd.f32 0.0, %v2297
    %v2299 = vpop.f32.mrb[0].mxu0
    %2300 = vmatprep.mubr.f32.mxu0 0.0
    %2301 = vmatmul.mubr.f32.gmra.mrb[0].mxu0 %v2223
    %v2302 = vpop.f32.mrb[0].mxu0
    %v2303 = vadd.f32 0.0, %v2302
    %v2304 = vpop.f32.mrb[0].mxu0
    %2305 = vmatprep.mubr.f32.mxu0 0.0
    %2306 = vmatmul.mubr.f32.gmra.mrb[0].mxu0 %v2226
    %v2307 = vpop.f32.mrb[0].mxu0
    %v2308 = vadd.f32 0.0, %v2307
    %v2309 = vpop.f32.mrb[0].mxu0
    %2310 = vmatprep.mubr.f32.mxu0 0.0
    %2311 = vmatmul.mubr.f32.gmra.mrb[0].mxu0 %v2229
    %v2312 = vpop.f32.mrb[0].mxu0
    %v2313 = vadd.f32 0.0, %v2312
    %v2314 = vpop.f32.mrb[0].mxu0
    %2315 = vdwg.mxu0
    %v2316 = vadd.f32 %v1813, %v2298
    %v2317 = vadd.f32 %v1814, %v2303
    %v2318 = vadd.f32 %v1815, %v2308
    %v2319 = vadd.f32 %v1816, %v2313
    %v2320 = vld [vmem:[%s7] sm:$0x1]
    %v2322 = vlaneseq
    %v2323 = vshrl.u32 %v2322, 7
    %v2324 = vsub.s32 0, %v2323
    %v2325 = vrot.slane %v2320, %v2324
    %v2327 = vadd.f32 %v2316, %v2325
    %v2328 = vadd.f32 %v2317, %v2325
    %v2329 = vadd.f32 %v2318, %v2325
    %v2330 = vadd.f32 %v2319, %v2325
    %2331 = vst.msk [vmem:[#allocation11] sm:$0xff] %vm117, %v2327
    %2332 = vst.msk [vmem:[#allocation11 + $0x8] sm:$0xff] %vm117, %v2328
    %2333 = vst.msk [vmem:[#allocation11 + $0x10] sm:$0xff] %vm117, %v2329
    %2334 = vst.msk [vmem:[#allocation11 + $0x18] sm:$0xff] %vm117, %v2330
    // Predicated region
    $region54: #{tpu_custom_call.1} parent=1 // pred_check
      _
    $region55: #{tpu_custom_call.1} parent=1 // pred_check_branch
      %2336 = sbr.rel (0) target = $region57
    $region56: #{tpu_custom_call.1} parent=1 // pred_region
      %s2338 = ssub.s32 512, 512
      %2339 = vsyncadd [#allocation4], %s2338
      %s2340 = sshll.u32 [#allocation11], 4
      %s2341 = int_to_ptr.vmem [resolvable:$true] %s2340
      %2346 = dma.vmem_to_hbm [thread:$0]  %s2341, 512, %s8, [#allocation4], 128, 128, 8
    $region57: #{tpu_custom_call.1} parent=1 // pred_fallthru
      _
    // Predicated region
    $region58: #{tpu_custom_call.1} parent=1 // pred_check
      _
    $region59: #{tpu_custom_call.1} parent=1 // pred_check_branch
      %2348 = sbr.rel (0) target = $region61
    $region60: #{tpu_custom_call.1} parent=1 // pred_region
      %2349 = dma.done [#allocation4], 512
    $region61: #{tpu_custom_call.1} parent=1 // pred_fallthru
      _
    %2350 = vsyncpa [#allocation3], 1
    %2351 = vsyncpa [#allocation6], 1
    %2352 = vsyncpa [#allocation9], 1
    %2353 = vsyncpa [#allocation4], 1

</llo_original>
